<compile_context>
chip_gen: v5e
topology: v5e:2x2
jax: 0.10.0
libtpu: 0.0.40
codegen_flags: <defaults>
</compile_context>

<pallas_src>
import functools

import jax
import jax.numpy as jnp
from jax import lax
from jax.experimental import pallas as pl
from jax.experimental.pallas import tpu as pltpu

# Scaled-down but lane-aligned model dims (original: embed=512, hidden=256).
VOCAB_SIZE = 64
EMBED_DIM = 128
HIDDEN_DIM = 128
FC1_DIM = 256
OUT_DIM = 3
OUT_PAD = 128   # lane-dense fc2 output width; first OUT_DIM columns are real


# ----------------------------- Pallas kernel --------------------------------

def _fused_lstm_head_kernel(gx_ref, mask_ref, whh_ref, w1h_ref, w1u_ref,
                            w1s_ref, b1_ref, w2_ref, b2_ref, ups_ref, sent_ref,
                            out_ref, *, t_max, min_len, batch, hidden):
    """Fused LSTM recurrence over 3 stacked sequences + fc1/relu/fc2 head.

    gx_ref:   (Tmax, R, 4H)  gate pre-activations (embedding@W_ih^T + b_ih + b_hh),
              R = 3*batch rows padded up to a multiple of 8 sublanes
    mask_ref: (Tmax, R, 1)   1.0 while a row is still inside its sequence
    whh_ref:  (H, 4H)        = weight_hh_l0.T
    w1h_ref:  (3H, FC1)      fc1 weight columns for the hidden concat
    w1u_ref:  (1, FC1)       fc1 column for ups
    w1s_ref:  (1, FC1)       fc1 column for sentiment
    b1_ref:   (1, FC1)
    w2_ref:   (FC1, OUT_PAD) fc2 weight, zero-padded to 128 lanes
    b2_ref:   (1, OUT_PAD)
    ups_ref:  (B, 1), sent_ref: (B, 1)
    out_ref:  (B, OUT_PAD)
    """
    R = gx_ref.shape[1]
    H = hidden
    whh = whh_ref[...]                        # loaded once, reused every step

    h = jnp.zeros((R, H), jnp.float32)
    c = jnp.zeros((R, H), jnp.float32)

    # Fully-unrolled (static, tiny T) recurrence. Only h@W_hh is on the serial
    # MXU path; the input projection was hoisted into the gate table.
    for t in range(t_max):
        gates = gx_ref[t] + jnp.dot(h, whh, preferred_element_type=jnp.float32)
        # PyTorch gate order: i, f, g, o
        i = jax.nn.sigmoid(gates[:, 0:H])
        f = jax.nn.sigmoid(gates[:, H:2 * H])
        g = jnp.tanh(gates[:, 2 * H:3 * H])
        o = jax.nn.sigmoid(gates[:, 3 * H:4 * H])
        c_new = f * c + i * g
        h_new = o * jnp.tanh(c_new)
        if t < min_len:
            # All rows still active: no masking needed at all.
            h, c = h_new, c_new
        else:
            # Rows whose sequence already ended carry h/c through unchanged.
            m = mask_ref[t]                   # (R, 1), 0.0 or 1.0
            h = m * h_new + (1.0 - m) * h
            c = m * c_new + (1.0 - m) * c

    h_comment = h[0:batch, :]
    h_title = h[batch:2 * batch, :]
    h_topic = h[2 * batch:3 * batch, :]

    # fc1 over cat(h_comment, h_title, h_topic, ups, sentiment), decomposed so
    # no lane-concat is needed: three (B,H)x(H,FC1) matmuls + two rank-1 adds.
    z = jnp.dot(h_comment, w1h_ref[0:H, :], preferred_element_type=jnp.float32)
    z = z + jnp.dot(h_title, w1h_ref[H:2 * H, :],
                    preferred_element_type=jnp.float32)
    z = z + jnp.dot(h_topic, w1h_ref[2 * H:3 * H, :],
                    preferred_element_type=jnp.float32)
    z = z + ups_ref[...] * w1u_ref[...]       # (B,1)*(1,FC1) -> (B,FC1)
    z = z + sent_ref[...] * w1s_ref[...]
    z = z + b1_ref[...]
    z = jnp.maximum(z, 0.0)                   # relu

    out_ref[...] = (jnp.dot(z, w2_ref[...], preferred_element_type=jnp.float32)
                    + b2_ref[...])


# ------------------------------ wrapper --------------------------------------

_VMEM = pl.BlockSpec(memory_space=pltpu.MemorySpace.VMEM)


def lstm_model_forward(params, comment, title, topic, ups, sentiment):
    B = comment.shape[0]
    Tc, Tt, Tp = comment.shape[1], title.shape[1], topic.shape[1]
    t_max = max(Tc, Tt, Tp)
    min_len = min(Tc, Tt, Tp)

    # Sublane-pad the stacked row dimension to a multiple of 8.
    rows = 3 * B
    r_pad = max(8, ((rows + 7) // 8) * 8)

    def pad_t(tok):
        return jnp.pad(tok, ((0, 0), (0, t_max - tok.shape[1])))

    # Stack the three sequences along batch: rows [0:B]=comment, [B:2B]=title,
    # [2B:3B]=topic, remaining rows are inert padding.  Padding token id 0 is
    # fine: padded steps/rows are masked out or never read.
    tokens = jnp.concatenate([pad_t(comment), pad_t(title), pad_t(topic)],
                             axis=0)                          # (3B, Tmax)
    tokens = jnp.pad(tokens, ((0, r_pad - rows), (0, 0)))     # (R, Tmax)

    # Fused embedding + input projection: gather precomputed gate pre-activations.
    gx = jnp.take(params["gate_table"], tokens, axis=0)       # (R, Tmax, 4H)
    gx = jnp.swapaxes(gx, 0, 1)                               # (Tmax, R, 4H)

    # Per-row activity mask (trace-time constant data; only read for t>=min_len).
    lengths = jnp.concatenate([
        jnp.full((B,), Tc, jnp.int32),
        jnp.full((B,), Tt, jnp.int32),
        jnp.full((B,), Tp, jnp.int32),
        jnp.zeros((r_pad - rows,), jnp.int32),
    ])                                                        # (R,)
    t_idx = jnp.arange(t_max, dtype=jnp.int32)[:, None]       # (Tmax, 1)
    mask = (t_idx < lengths[None, :]).astype(jnp.float32)[..., None]  # (Tmax, R, 1)

    whh_t = params["whh_t"]
    w1h, w1u, w1s, b1 = params["fc1"]
    w2, b2 = params["fc2"]

    kernel = functools.partial(_fused_lstm_head_kernel, t_max=t_max,
                               min_len=min_len, batch=B, hidden=HIDDEN_DIM)
    out_pad = pl.pallas_call(
        kernel,
        out_shape=jax.ShapeDtypeStruct((B, OUT_PAD), jnp.float32),
        in_specs=[_VMEM] * 11,
        out_specs=_VMEM,
    )(gx, mask, whh_t, w1h, w1u, w1s, b1, w2, b2, ups, sentiment)

    # ups.squeeze(1).unsqueeze(1) on a (B,1) tensor is a no-op (handled above).
    return out_pad[:, :OUT_DIM]


# --------------------------- parameter init ----------------------------------

def init_params(key):
    ks = jax.random.split(key, 8)
    H, E = HIDDEN_DIM, EMBED_DIM

    embedding = jax.random.normal(ks[0], (VOCAB_SIZE, E), jnp.float32) * 0.1

    # PyTorch nn.LSTM parameter shapes: weight_ih (4H,E), weight_hh (4H,H), biases (4H,)
    w_ih = jax.random.normal(ks[1], (4 * H, E), jnp.float32) * (1.0 / jnp.sqrt(H))
    w_hh = jax.random.normal(ks[2], (4 * H, H), jnp.float32) * (1.0 / jnp.sqrt(H))
    b_ih = jax.random.normal(ks[3], (4 * H,), jnp.float32) * 0.05
    b_hh = jax.random.normal(ks[4], (4 * H,), jnp.float32) * 0.05

    # nn.Linear(3H+2, 256): weight (256, 3H+2), bias (256,)
    fc1_w = jax.random.normal(ks[5], (FC1_DIM, 3 * H + 2), jnp.float32) * 0.05
    fc1_b = jax.random.normal(ks[6], (FC1_DIM,), jnp.float32) * 0.05
    # nn.Linear(256, 3): weight (3, 256), bias (3,)
    fc2_w = jax.random.normal(ks[7], (OUT_DIM, FC1_DIM), jnp.float32) * 0.05
    fc2_b = jnp.zeros((OUT_DIM,), jnp.float32)

    # Fold embedding -> input projection -> both biases into one gather table:
    # gate_table[v] = embedding[v] @ W_ih.T + (b_ih + b_hh)          (VOCAB, 4H)
    gate_table = embedding @ w_ih.T + (b_ih + b_hh)[None, :]

    # fc2 padded to a lane-dense (FC1, 128) output so the final store is unmasked.
    w2_pad = jnp.zeros((FC1_DIM, OUT_PAD), jnp.float32).at[:, :OUT_DIM].set(fc2_w.T)
    b2_pad = jnp.zeros((1, OUT_PAD), jnp.float32).at[:, :OUT_DIM].set(fc2_b)

    params = {
        "gate_table": gate_table,               # (VOCAB, 4H)
        "whh_t": w_hh.T,                        # (H, 4H)
        "fc1": (
            fc1_w[:, :3 * H].T,                 # (3H, 256)
            fc1_w[:, 3 * H:3 * H + 1].T,        # (1, 256) column for ups
            fc1_w[:, 3 * H + 1:3 * H + 2].T,    # (1, 256) column for sentiment
            fc1_b[None, :],                     # (1, 256)
        ),
        "fc2": (w2_pad, b2_pad),                # (256, 128), (1, 128)
    }
    torch_like = dict(w_ih=w_ih, w_hh=w_hh, b_ih=b_ih, b_hh=b_hh,
                      fc1_w=fc1_w, fc1_b=fc1_b, fc2_w=fc2_w, fc2_b=fc2_b,
                      embedding=embedding)
    return params, torch_like


# ---------------------------- pure-JAX reference ------------------------------

def _lstm_ref(x_bte, w_ih, w_hh, b_ih, b_hh):
    B = x_bte.shape[0]
    H = w_hh.shape[1]

    def step(carry, x_t):
        h, c = carry
        gates = x_t @ w_ih.T + b_ih + h @ w_hh.T + b_hh
        i, f, g, o = jnp.split(gates, 4, axis=1)
        i = jax.nn.sigmoid(i)
        f = jax.nn.sigmoid(f)
        g = jnp.tanh(g)
        o = jax.nn.sigmoid(o)
        c = f * c + i * g
        h = o * jnp.tanh(c)
        return (h, c), None

    init = (jnp.zeros((B, H), jnp.float32), jnp.zeros((B, H), jnp.float32))
    (h, _), _ = lax.scan(step, init, jnp.swapaxes(x_bte, 0, 1))
    return h


def forward_ref(tl, comment, title, topic, ups, sentiment):
    def embed(t):
        return jnp.take(tl["embedding"], t, axis=0)

    h_c = _lstm_ref(embed(comment), tl["w_ih"], tl["w_hh"], tl["b_ih"], tl["b_hh"])
    h_t = _lstm_ref(embed(title), tl["w_ih"], tl["w_hh"], tl["b_ih"], tl["b_hh"])
    h_p = _lstm_ref(embed(topic), tl["w_ih"], tl["w_hh"], tl["b_ih"], tl["b_hh"])
    combined = jnp.concatenate([h_c, h_t, h_p, ups, sentiment], axis=1)
    x = jnp.maximum(combined @ tl["fc1_w"].T + tl["fc1_b"], 0.0)
    return x @ tl["fc2_w"].T + tl["fc2_b"]


# --------------------------------- main ---------------------------------------

if __name__ == "__main__":
    key = jax.random.PRNGKey(0)
    k_par, k_c, k_t, k_p, k_u, k_s = jax.random.split(key, 6)

    params, torch_like = init_params(k_par)

    B, Tc, Tt, Tp = 2, 8, 6, 4
    comment = jax.random.randint(k_c, (B, Tc), 0, VOCAB_SIZE, jnp.int32)
    title = jax.random.randint(k_t, (B, Tt), 0, VOCAB_SIZE, jnp.int32)
    topic = jax.random.randint(k_p, (B, Tp), 0, VOCAB_SIZE, jnp.int32)
    ups = jax.random.normal(k_u, (B, 1), jnp.float32)
    sentiment = jax.random.normal(k_s, (B, 1), jnp.float32)

    fwd = jax.jit(lstm_model_forward)
    out = fwd(params, comment, title, topic, ups, sentiment)
    out = jax.block_until_ready(out)
    assert out.shape == (B, OUT_DIM), out.shape

    ref = forward_ref(torch_like, comment, title, topic, ups, sentiment)
    ref = jax.block_until_ready(ref)
    assert jnp.allclose(out, ref, rtol=1e-3, atol=1e-3), (out, ref)

    print("KERNEL_OK")
</pallas_src>

<mosaic_0001>
module attributes {stable_mosaic.version = 11 : i64} {
  func.func @_fused_lstm_head_kernel(%arg0: memref<8x8x512xf32, #tpu.memory_space<vmem>>, %arg1: memref<8x8x1xf32, #tpu.memory_space<vmem>>, %arg2: memref<128x512xf32, #tpu.memory_space<vmem>>, %arg3: memref<384x256xf32, #tpu.memory_space<vmem>>, %arg4: memref<1x256xf32, #tpu.memory_space<vmem>>, %arg5: memref<1x256xf32, #tpu.memory_space<vmem>>, %arg6: memref<1x256xf32, #tpu.memory_space<vmem>>, %arg7: memref<256x128xf32, #tpu.memory_space<vmem>>, %arg8: memref<1x128xf32, #tpu.memory_space<vmem>>, %arg9: memref<2x1xf32, #tpu.memory_space<vmem>>, %arg10: memref<2x1xf32, #tpu.memory_space<vmem>>, %arg11: memref<2x128xf32, #tpu.memory_space<vmem>>) attributes {dimension_semantics = [], scalar_prefetch = 0 : i64, scratch_operands = 0 : i64, tpu.core_type = #tpu.core_type<tc>} {
    %c0 = arith.constant 0 : index
    %c0_0 = arith.constant 0 : index
    %0 = vector.load %arg2[%c0, %c0_0] : memref<128x512xf32, #tpu.memory_space<vmem>>, vector<128x512xf32>
    %cst = arith.constant 0.000000e+00 : f32
    %1 = vector.broadcast %cst : f32 to vector<8x128xf32>
    %cst_1 = arith.constant 0.000000e+00 : f32
    %2 = vector.broadcast %cst_1 : f32 to vector<8x128xf32>
    %c0_2 = arith.constant 0 : index
    %c0_3 = arith.constant 0 : index
    %c0_4 = arith.constant 0 : index
    %3 = vector.load %arg0[%c0_2, %c0_3, %c0_4] : memref<8x8x512xf32, #tpu.memory_space<vmem>>, vector<1x8x512xf32>
    %4 = vector.shape_cast %3 : vector<1x8x512xf32> to vector<8x512xf32>
    %cst_5 = arith.constant dense<0.000000e+00> : vector<8x512xf32>
    %5 = tpu.matmul %1, %0, %cst_5 {dimension_numbers = #tpu.dot_dimension_numbers<[1], [0], [0], [1], [0, 0, 1, 1], [], []>} : vector<8x128xf32>, vector<128x512xf32>, vector<8x512xf32> -> vector<8x512xf32>
    %6 = arith.addf %4, %5 : vector<8x512xf32>
    %7 = vector.extract_strided_slice %6 {offsets = [0, 0], sizes = [8, 128], strides = [1, 1]} : vector<8x512xf32> to vector<8x128xf32>
    %8 = arith.negf %7 : vector<8x128xf32>
    %9 = math.exp %8 : vector<8x128xf32>
    %cst_6 = arith.constant 1.000000e+00 : f32
    %10 = vector.broadcast %cst_6 : f32 to vector<8x128xf32>
    %11 = arith.addf %10, %9 : vector<8x128xf32>
    %12 = arith.divf %10, %11 : vector<8x128xf32>
    %13 = vector.extract_strided_slice %6 {offsets = [0, 128], sizes = [8, 128], strides = [1, 1]} : vector<8x512xf32> to vector<8x128xf32>
    %14 = arith.negf %13 : vector<8x128xf32>
    %15 = math.exp %14 : vector<8x128xf32>
    %cst_7 = arith.constant 1.000000e+00 : f32
    %16 = vector.broadcast %cst_7 : f32 to vector<8x128xf32>
    %17 = arith.addf %16, %15 : vector<8x128xf32>
    %18 = arith.divf %16, %17 : vector<8x128xf32>
    %19 = vector.extract_strided_slice %6 {offsets = [0, 256], sizes = [8, 128], strides = [1, 1]} : vector<8x512xf32> to vector<8x128xf32>
    %20 = math.tanh %19 : vector<8x128xf32>
    %21 = vector.extract_strided_slice %6 {offsets = [0, 384], sizes = [8, 128], strides = [1, 1]} : vector<8x512xf32> to vector<8x128xf32>
    %22 = arith.negf %21 : vector<8x128xf32>
    %23 = math.exp %22 : vector<8x128xf32>
    %cst_8 = arith.constant 1.000000e+00 : f32
    %24 = vector.broadcast %cst_8 : f32 to vector<8x128xf32>
    %25 = arith.addf %24, %23 : vector<8x128xf32>
    %26 = arith.divf %24, %25 : vector<8x128xf32>
    %27 = arith.mulf %18, %2 : vector<8x128xf32>
    %28 = arith.mulf %12, %20 : vector<8x128xf32>
    %29 = arith.addf %27, %28 : vector<8x128xf32>
    %30 = math.tanh %29 : vector<8x128xf32>
    %31 = arith.mulf %26, %30 : vector<8x128xf32>
    %c1 = arith.constant 1 : index
    %c0_9 = arith.constant 0 : index
    %c0_10 = arith.constant 0 : index
    %32 = vector.load %arg0[%c1, %c0_9, %c0_10] : memref<8x8x512xf32, #tpu.memory_space<vmem>>, vector<1x8x512xf32>
    %33 = vector.shape_cast %32 : vector<1x8x512xf32> to vector<8x512xf32>
    %cst_11 = arith.constant dense<0.000000e+00> : vector<8x512xf32>
    %34 = tpu.matmul %31, %0, %cst_11 {dimension_numbers = #tpu.dot_dimension_numbers<[1], [0], [0], [1], [0, 0, 1, 1], [], []>} : vector<8x128xf32>, vector<128x512xf32>, vector<8x512xf32> -> vector<8x512xf32>
    %35 = arith.addf %33, %34 : vector<8x512xf32>
    %36 = vector.extract_strided_slice %35 {offsets = [0, 0], sizes = [8, 128], strides = [1, 1]} : vector<8x512xf32> to vector<8x128xf32>
    %37 = arith.negf %36 : vector<8x128xf32>
    %38 = math.exp %37 : vector<8x128xf32>
    %cst_12 = arith.constant 1.000000e+00 : f32
    %39 = vector.broadcast %cst_12 : f32 to vector<8x128xf32>
    %40 = arith.addf %39, %38 : vector<8x128xf32>
    %41 = arith.divf %39, %40 : vector<8x128xf32>
    %42 = vector.extract_strided_slice %35 {offsets = [0, 128], sizes = [8, 128], strides = [1, 1]} : vector<8x512xf32> to vector<8x128xf32>
    %43 = arith.negf %42 : vector<8x128xf32>
    %44 = math.exp %43 : vector<8x128xf32>
    %cst_13 = arith.constant 1.000000e+00 : f32
    %45 = vector.broadcast %cst_13 : f32 to vector<8x128xf32>
    %46 = arith.addf %45, %44 : vector<8x128xf32>
    %47 = arith.divf %45, %46 : vector<8x128xf32>
    %48 = vector.extract_strided_slice %35 {offsets = [0, 256], sizes = [8, 128], strides = [1, 1]} : vector<8x512xf32> to vector<8x128xf32>
    %49 = math.tanh %48 : vector<8x128xf32>
    %50 = vector.extract_strided_slice %35 {offsets = [0, 384], sizes = [8, 128], strides = [1, 1]} : vector<8x512xf32> to vector<8x128xf32>
    %51 = arith.negf %50 : vector<8x128xf32>
    %52 = math.exp %51 : vector<8x128xf32>
    %cst_14 = arith.constant 1.000000e+00 : f32
    %53 = vector.broadcast %cst_14 : f32 to vector<8x128xf32>
    %54 = arith.addf %53, %52 : vector<8x128xf32>
    %55 = arith.divf %53, %54 : vector<8x128xf32>
    %56 = arith.mulf %47, %29 : vector<8x128xf32>
    %57 = arith.mulf %41, %49 : vector<8x128xf32>
    %58 = arith.addf %56, %57 : vector<8x128xf32>
    %59 = math.tanh %58 : vector<8x128xf32>
    %60 = arith.mulf %55, %59 : vector<8x128xf32>
    %c2 = arith.constant 2 : index
    %c0_15 = arith.constant 0 : index
    %c0_16 = arith.constant 0 : index
    %61 = vector.load %arg0[%c2, %c0_15, %c0_16] : memref<8x8x512xf32, #tpu.memory_space<vmem>>, vector<1x8x512xf32>
    %62 = vector.shape_cast %61 : vector<1x8x512xf32> to vector<8x512xf32>
    %cst_17 = arith.constant dense<0.000000e+00> : vector<8x512xf32>
    %63 = tpu.matmul %60, %0, %cst_17 {dimension_numbers = #tpu.dot_dimension_numbers<[1], [0], [0], [1], [0, 0, 1, 1], [], []>} : vector<8x128xf32>, vector<128x512xf32>, vector<8x512xf32> -> vector<8x512xf32>
    %64 = arith.addf %62, %63 : vector<8x512xf32>
    %65 = vector.extract_strided_slice %64 {offsets = [0, 0], sizes = [8, 128], strides = [1, 1]} : vector<8x512xf32> to vector<8x128xf32>
    %66 = arith.negf %65 : vector<8x128xf32>
    %67 = math.exp %66 : vector<8x128xf32>
    %cst_18 = arith.constant 1.000000e+00 : f32
    %68 = vector.broadcast %cst_18 : f32 to vector<8x128xf32>
    %69 = arith.addf %68, %67 : vector<8x128xf32>
    %70 = arith.divf %68, %69 : vector<8x128xf32>
    %71 = vector.extract_strided_slice %64 {offsets = [0, 128], sizes = [8, 128], strides = [1, 1]} : vector<8x512xf32> to vector<8x128xf32>
    %72 = arith.negf %71 : vector<8x128xf32>
    %73 = math.exp %72 : vector<8x128xf32>
    %cst_19 = arith.constant 1.000000e+00 : f32
    %74 = vector.broadcast %cst_19 : f32 to vector<8x128xf32>
    %75 = arith.addf %74, %73 : vector<8x128xf32>
    %76 = arith.divf %74, %75 : vector<8x128xf32>
    %77 = vector.extract_strided_slice %64 {offsets = [0, 256], sizes = [8, 128], strides = [1, 1]} : vector<8x512xf32> to vector<8x128xf32>
    %78 = math.tanh %77 : vector<8x128xf32>
    %79 = vector.extract_strided_slice %64 {offsets = [0, 384], sizes = [8, 128], strides = [1, 1]} : vector<8x512xf32> to vector<8x128xf32>
    %80 = arith.negf %79 : vector<8x128xf32>
    %81 = math.exp %80 : vector<8x128xf32>
    %cst_20 = arith.constant 1.000000e+00 : f32
    %82 = vector.broadcast %cst_20 : f32 to vector<8x128xf32>
    %83 = arith.addf %82, %81 : vector<8x128xf32>
    %84 = arith.divf %82, %83 : vector<8x128xf32>
    %85 = arith.mulf %76, %58 : vector<8x128xf32>
    %86 = arith.mulf %70, %78 : vector<8x128xf32>
    %87 = arith.addf %85, %86 : vector<8x128xf32>
    %88 = math.tanh %87 : vector<8x128xf32>
    %89 = arith.mulf %84, %88 : vector<8x128xf32>
    %c3 = arith.constant 3 : index
    %c0_21 = arith.constant 0 : index
    %c0_22 = arith.constant 0 : index
    %90 = vector.load %arg0[%c3, %c0_21, %c0_22] : memref<8x8x512xf32, #tpu.memory_space<vmem>>, vector<1x8x512xf32>
    %91 = vector.shape_cast %90 : vector<1x8x512xf32> to vector<8x512xf32>
    %cst_23 = arith.constant dense<0.000000e+00> : vector<8x512xf32>
    %92 = tpu.matmul %89, %0, %cst_23 {dimension_numbers = #tpu.dot_dimension_numbers<[1], [0], [0], [1], [0, 0, 1, 1], [], []>} : vector<8x128xf32>, vector<128x512xf32>, vector<8x512xf32> -> vector<8x512xf32>
    %93 = arith.addf %91, %92 : vector<8x512xf32>
    %94 = vector.extract_strided_slice %93 {offsets = [0, 0], sizes = [8, 128], strides = [1, 1]} : vector<8x512xf32> to vector<8x128xf32>
    %95 = arith.negf %94 : vector<8x128xf32>
    %96 = math.exp %95 : vector<8x128xf32>
    %cst_24 = arith.constant 1.000000e+00 : f32
    %97 = vector.broadcast %cst_24 : f32 to vector<8x128xf32>
    %98 = arith.addf %97, %96 : vector<8x128xf32>
    %99 = arith.divf %97, %98 : vector<8x128xf32>
    %100 = vector.extract_strided_slice %93 {offsets = [0, 128], sizes = [8, 128], strides = [1, 1]} : vector<8x512xf32> to vector<8x128xf32>
    %101 = arith.negf %100 : vector<8x128xf32>
    %102 = math.exp %101 : vector<8x128xf32>
    %cst_25 = arith.constant 1.000000e+00 : f32
    %103 = vector.broadcast %cst_25 : f32 to vector<8x128xf32>
    %104 = arith.addf %103, %102 : vector<8x128xf32>
    %105 = arith.divf %103, %104 : vector<8x128xf32>
    %106 = vector.extract_strided_slice %93 {offsets = [0, 256], sizes = [8, 128], strides = [1, 1]} : vector<8x512xf32> to vector<8x128xf32>
    %107 = math.tanh %106 : vector<8x128xf32>
    %108 = vector.extract_strided_slice %93 {offsets = [0, 384], sizes = [8, 128], strides = [1, 1]} : vector<8x512xf32> to vector<8x128xf32>
    %109 = arith.negf %108 : vector<8x128xf32>
    %110 = math.exp %109 : vector<8x128xf32>
    %cst_26 = arith.constant 1.000000e+00 : f32
    %111 = vector.broadcast %cst_26 : f32 to vector<8x128xf32>
    %112 = arith.addf %111, %110 : vector<8x128xf32>
    %113 = arith.divf %111, %112 : vector<8x128xf32>
    %114 = arith.mulf %105, %87 : vector<8x128xf32>
    %115 = arith.mulf %99, %107 : vector<8x128xf32>
    %116 = arith.addf %114, %115 : vector<8x128xf32>
    %117 = math.tanh %116 : vector<8x128xf32>
    %118 = arith.mulf %113, %117 : vector<8x128xf32>
    %c4 = arith.constant 4 : index
    %c0_27 = arith.constant 0 : index
    %c0_28 = arith.constant 0 : index
    %119 = vector.load %arg0[%c4, %c0_27, %c0_28] : memref<8x8x512xf32, #tpu.memory_space<vmem>>, vector<1x8x512xf32>
    %120 = vector.shape_cast %119 : vector<1x8x512xf32> to vector<8x512xf32>
    %cst_29 = arith.constant dense<0.000000e+00> : vector<8x512xf32>
    %121 = tpu.matmul %118, %0, %cst_29 {dimension_numbers = #tpu.dot_dimension_numbers<[1], [0], [0], [1], [0, 0, 1, 1], [], []>} : vector<8x128xf32>, vector<128x512xf32>, vector<8x512xf32> -> vector<8x512xf32>
    %122 = arith.addf %120, %121 : vector<8x512xf32>
    %123 = vector.extract_strided_slice %122 {offsets = [0, 0], sizes = [8, 128], strides = [1, 1]} : vector<8x512xf32> to vector<8x128xf32>
    %124 = arith.negf %123 : vector<8x128xf32>
    %125 = math.exp %124 : vector<8x128xf32>
    %cst_30 = arith.constant 1.000000e+00 : f32
    %126 = vector.broadcast %cst_30 : f32 to vector<8x128xf32>
    %127 = arith.addf %126, %125 : vector<8x128xf32>
    %128 = arith.divf %126, %127 : vector<8x128xf32>
    %129 = vector.extract_strided_slice %122 {offsets = [0, 128], sizes = [8, 128], strides = [1, 1]} : vector<8x512xf32> to vector<8x128xf32>
    %130 = arith.negf %129 : vector<8x128xf32>
    %131 = math.exp %130 : vector<8x128xf32>
    %cst_31 = arith.constant 1.000000e+00 : f32
    %132 = vector.broadcast %cst_31 : f32 to vector<8x128xf32>
    %133 = arith.addf %132, %131 : vector<8x128xf32>
    %134 = arith.divf %132, %133 : vector<8x128xf32>
    %135 = vector.extract_strided_slice %122 {offsets = [0, 256], sizes = [8, 128], strides = [1, 1]} : vector<8x512xf32> to vector<8x128xf32>
    %136 = math.tanh %135 : vector<8x128xf32>
    %137 = vector.extract_strided_slice %122 {offsets = [0, 384], sizes = [8, 128], strides = [1, 1]} : vector<8x512xf32> to vector<8x128xf32>
    %138 = arith.negf %137 : vector<8x128xf32>
    %139 = math.exp %138 : vector<8x128xf32>
    %cst_32 = arith.constant 1.000000e+00 : f32
    %140 = vector.broadcast %cst_32 : f32 to vector<8x128xf32>
    %141 = arith.addf %140, %139 : vector<8x128xf32>
    %142 = arith.divf %140, %141 : vector<8x128xf32>
    %143 = arith.mulf %134, %116 : vector<8x128xf32>
    %144 = arith.mulf %128, %136 : vector<8x128xf32>
    %145 = arith.addf %143, %144 : vector<8x128xf32>
    %146 = math.tanh %145 : vector<8x128xf32>
    %147 = arith.mulf %142, %146 : vector<8x128xf32>
    %c4_33 = arith.constant 4 : index
    %c0_34 = arith.constant 0 : index
    %c0_35 = arith.constant 0 : index
    %148 = vector.load %arg1[%c4_33, %c0_34, %c0_35] : memref<8x8x1xf32, #tpu.memory_space<vmem>>, vector<1x8x1xf32>
    %149 = vector.shape_cast %148 : vector<1x8x1xf32> to vector<8x1xf32>
    %150 = vector.broadcast %149 : vector<8x1xf32> to vector<8x128xf32>
    %151 = arith.mulf %150, %147 : vector<8x128xf32>
    %cst_36 = arith.constant 1.000000e+00 : f32
    %152 = vector.broadcast %cst_36 : f32 to vector<8x1xf32>
    %153 = arith.subf %152, %149 : vector<8x1xf32>
    %154 = vector.broadcast %153 : vector<8x1xf32> to vector<8x128xf32>
    %155 = arith.mulf %154, %118 : vector<8x128xf32>
    %156 = arith.addf %151, %155 : vector<8x128xf32>
    %157 = vector.broadcast %149 : vector<8x1xf32> to vector<8x128xf32>
    %158 = arith.mulf %157, %145 : vector<8x128xf32>
    %cst_37 = arith.constant 1.000000e+00 : f32
    %159 = vector.broadcast %cst_37 : f32 to vector<8x1xf32>
    %160 = arith.subf %159, %149 : vector<8x1xf32>
    %161 = vector.broadcast %160 : vector<8x1xf32> to vector<8x128xf32>
    %162 = arith.mulf %161, %116 : vector<8x128xf32>
    %163 = arith.addf %158, %162 : vector<8x128xf32>
    %c5 = arith.constant 5 : index
    %c0_38 = arith.constant 0 : index
    %c0_39 = arith.constant 0 : index
    %164 = vector.load %arg0[%c5, %c0_38, %c0_39] : memref<8x8x512xf32, #tpu.memory_space<vmem>>, vector<1x8x512xf32>
    %165 = vector.shape_cast %164 : vector<1x8x512xf32> to vector<8x512xf32>
    %cst_40 = arith.constant dense<0.000000e+00> : vector<8x512xf32>
    %166 = tpu.matmul %156, %0, %cst_40 {dimension_numbers = #tpu.dot_dimension_numbers<[1], [0], [0], [1], [0, 0, 1, 1], [], []>} : vector<8x128xf32>, vector<128x512xf32>, vector<8x512xf32> -> vector<8x512xf32>
    %167 = arith.addf %165, %166 : vector<8x512xf32>
    %168 = vector.extract_strided_slice %167 {offsets = [0, 0], sizes = [8, 128], strides = [1, 1]} : vector<8x512xf32> to vector<8x128xf32>
    %169 = arith.negf %168 : vector<8x128xf32>
    %170 = math.exp %169 : vector<8x128xf32>
    %cst_41 = arith.constant 1.000000e+00 : f32
    %171 = vector.broadcast %cst_41 : f32 to vector<8x128xf32>
    %172 = arith.addf %171, %170 : vector<8x128xf32>
    %173 = arith.divf %171, %172 : vector<8x128xf32>
    %174 = vector.extract_strided_slice %167 {offsets = [0, 128], sizes = [8, 128], strides = [1, 1]} : vector<8x512xf32> to vector<8x128xf32>
    %175 = arith.negf %174 : vector<8x128xf32>
    %176 = math.exp %175 : vector<8x128xf32>
    %cst_42 = arith.constant 1.000000e+00 : f32
    %177 = vector.broadcast %cst_42 : f32 to vector<8x128xf32>
    %178 = arith.addf %177, %176 : vector<8x128xf32>
    %179 = arith.divf %177, %178 : vector<8x128xf32>
    %180 = vector.extract_strided_slice %167 {offsets = [0, 256], sizes = [8, 128], strides = [1, 1]} : vector<8x512xf32> to vector<8x128xf32>
    %181 = math.tanh %180 : vector<8x128xf32>
    %182 = vector.extract_strided_slice %167 {offsets = [0, 384], sizes = [8, 128], strides = [1, 1]} : vector<8x512xf32> to vector<8x128xf32>
    %183 = arith.negf %182 : vector<8x128xf32>
    %184 = math.exp %183 : vector<8x128xf32>
    %cst_43 = arith.constant 1.000000e+00 : f32
    %185 = vector.broadcast %cst_43 : f32 to vector<8x128xf32>
    %186 = arith.addf %185, %184 : vector<8x128xf32>
    %187 = arith.divf %185, %186 : vector<8x128xf32>
    %188 = arith.mulf %179, %163 : vector<8x128xf32>
    %189 = arith.mulf %173, %181 : vector<8x128xf32>
    %190 = arith.addf %188, %189 : vector<8x128xf32>
    %191 = math.tanh %190 : vector<8x128xf32>
    %192 = arith.mulf %187, %191 : vector<8x128xf32>
    %c5_44 = arith.constant 5 : index
    %c0_45 = arith.constant 0 : index
    %c0_46 = arith.constant 0 : index
    %193 = vector.load %arg1[%c5_44, %c0_45, %c0_46] : memref<8x8x1xf32, #tpu.memory_space<vmem>>, vector<1x8x1xf32>
    %194 = vector.shape_cast %193 : vector<1x8x1xf32> to vector<8x1xf32>
    %195 = vector.broadcast %194 : vector<8x1xf32> to vector<8x128xf32>
    %196 = arith.mulf %195, %192 : vector<8x128xf32>
    %cst_47 = arith.constant 1.000000e+00 : f32
    %197 = vector.broadcast %cst_47 : f32 to vector<8x1xf32>
    %198 = arith.subf %197, %194 : vector<8x1xf32>
    %199 = vector.broadcast %198 : vector<8x1xf32> to vector<8x128xf32>
    %200 = arith.mulf %199, %156 : vector<8x128xf32>
    %201 = arith.addf %196, %200 : vector<8x128xf32>
    %202 = vector.broadcast %194 : vector<8x1xf32> to vector<8x128xf32>
    %203 = arith.mulf %202, %190 : vector<8x128xf32>
    %cst_48 = arith.constant 1.000000e+00 : f32
    %204 = vector.broadcast %cst_48 : f32 to vector<8x1xf32>
    %205 = arith.subf %204, %194 : vector<8x1xf32>
    %206 = vector.broadcast %205 : vector<8x1xf32> to vector<8x128xf32>
    %207 = arith.mulf %206, %163 : vector<8x128xf32>
    %208 = arith.addf %203, %207 : vector<8x128xf32>
    %c6 = arith.constant 6 : index
    %c0_49 = arith.constant 0 : index
    %c0_50 = arith.constant 0 : index
    %209 = vector.load %arg0[%c6, %c0_49, %c0_50] : memref<8x8x512xf32, #tpu.memory_space<vmem>>, vector<1x8x512xf32>
    %210 = vector.shape_cast %209 : vector<1x8x512xf32> to vector<8x512xf32>
    %cst_51 = arith.constant dense<0.000000e+00> : vector<8x512xf32>
    %211 = tpu.matmul %201, %0, %cst_51 {dimension_numbers = #tpu.dot_dimension_numbers<[1], [0], [0], [1], [0, 0, 1, 1], [], []>} : vector<8x128xf32>, vector<128x512xf32>, vector<8x512xf32> -> vector<8x512xf32>
    %212 = arith.addf %210, %211 : vector<8x512xf32>
    %213 = vector.extract_strided_slice %212 {offsets = [0, 0], sizes = [8, 128], strides = [1, 1]} : vector<8x512xf32> to vector<8x128xf32>
    %214 = arith.negf %213 : vector<8x128xf32>
    %215 = math.exp %214 : vector<8x128xf32>
    %cst_52 = arith.constant 1.000000e+00 : f32
    %216 = vector.broadcast %cst_52 : f32 to vector<8x128xf32>
    %217 = arith.addf %216, %215 : vector<8x128xf32>
    %218 = arith.divf %216, %217 : vector<8x128xf32>
    %219 = vector.extract_strided_slice %212 {offsets = [0, 128], sizes = [8, 128], strides = [1, 1]} : vector<8x512xf32> to vector<8x128xf32>
    %220 = arith.negf %219 : vector<8x128xf32>
    %221 = math.exp %220 : vector<8x128xf32>
    %cst_53 = arith.constant 1.000000e+00 : f32
    %222 = vector.broadcast %cst_53 : f32 to vector<8x128xf32>
    %223 = arith.addf %222, %221 : vector<8x128xf32>
    %224 = arith.divf %222, %223 : vector<8x128xf32>
    %225 = vector.extract_strided_slice %212 {offsets = [0, 256], sizes = [8, 128], strides = [1, 1]} : vector<8x512xf32> to vector<8x128xf32>
    %226 = math.tanh %225 : vector<8x128xf32>
    %227 = vector.extract_strided_slice %212 {offsets = [0, 384], sizes = [8, 128], strides = [1, 1]} : vector<8x512xf32> to vector<8x128xf32>
    %228 = arith.negf %227 : vector<8x128xf32>
    %229 = math.exp %228 : vector<8x128xf32>
    %cst_54 = arith.constant 1.000000e+00 : f32
    %230 = vector.broadcast %cst_54 : f32 to vector<8x128xf32>
    %231 = arith.addf %230, %229 : vector<8x128xf32>
    %232 = arith.divf %230, %231 : vector<8x128xf32>
    %233 = arith.mulf %224, %208 : vector<8x128xf32>
    %234 = arith.mulf %218, %226 : vector<8x128xf32>
    %235 = arith.addf %233, %234 : vector<8x128xf32>
    %236 = math.tanh %235 : vector<8x128xf32>
    %237 = arith.mulf %232, %236 : vector<8x128xf32>
    %c6_55 = arith.constant 6 : index
    %c0_56 = arith.constant 0 : index
    %c0_57 = arith.constant 0 : index
    %238 = vector.load %arg1[%c6_55, %c0_56, %c0_57] : memref<8x8x1xf32, #tpu.memory_space<vmem>>, vector<1x8x1xf32>
    %239 = vector.shape_cast %238 : vector<1x8x1xf32> to vector<8x1xf32>
    %240 = vector.broadcast %239 : vector<8x1xf32> to vector<8x128xf32>
    %241 = arith.mulf %240, %237 : vector<8x128xf32>
    %cst_58 = arith.constant 1.000000e+00 : f32
    %242 = vector.broadcast %cst_58 : f32 to vector<8x1xf32>
    %243 = arith.subf %242, %239 : vector<8x1xf32>
    %244 = vector.broadcast %243 : vector<8x1xf32> to vector<8x128xf32>
    %245 = arith.mulf %244, %201 : vector<8x128xf32>
    %246 = arith.addf %241, %245 : vector<8x128xf32>
    %247 = vector.broadcast %239 : vector<8x1xf32> to vector<8x128xf32>
    %248 = arith.mulf %247, %235 : vector<8x128xf32>
    %cst_59 = arith.constant 1.000000e+00 : f32
    %249 = vector.broadcast %cst_59 : f32 to vector<8x1xf32>
    %250 = arith.subf %249, %239 : vector<8x1xf32>
    %251 = vector.broadcast %250 : vector<8x1xf32> to vector<8x128xf32>
    %252 = arith.mulf %251, %208 : vector<8x128xf32>
    %253 = arith.addf %248, %252 : vector<8x128xf32>
    %c7 = arith.constant 7 : index
    %c0_60 = arith.constant 0 : index
    %c0_61 = arith.constant 0 : index
    %254 = vector.load %arg0[%c7, %c0_60, %c0_61] : memref<8x8x512xf32, #tpu.memory_space<vmem>>, vector<1x8x512xf32>
    %255 = vector.shape_cast %254 : vector<1x8x512xf32> to vector<8x512xf32>
    %cst_62 = arith.constant dense<0.000000e+00> : vector<8x512xf32>
    %256 = tpu.matmul %246, %0, %cst_62 {dimension_numbers = #tpu.dot_dimension_numbers<[1], [0], [0], [1], [0, 0, 1, 1], [], []>} : vector<8x128xf32>, vector<128x512xf32>, vector<8x512xf32> -> vector<8x512xf32>
    %257 = arith.addf %255, %256 : vector<8x512xf32>
    %258 = vector.extract_strided_slice %257 {offsets = [0, 0], sizes = [8, 128], strides = [1, 1]} : vector<8x512xf32> to vector<8x128xf32>
    %259 = arith.negf %258 : vector<8x128xf32>
    %260 = math.exp %259 : vector<8x128xf32>
    %cst_63 = arith.constant 1.000000e+00 : f32
    %261 = vector.broadcast %cst_63 : f32 to vector<8x128xf32>
    %262 = arith.addf %261, %260 : vector<8x128xf32>
    %263 = arith.divf %261, %262 : vector<8x128xf32>
    %264 = vector.extract_strided_slice %257 {offsets = [0, 128], sizes = [8, 128], strides = [1, 1]} : vector<8x512xf32> to vector<8x128xf32>
    %265 = arith.negf %264 : vector<8x128xf32>
    %266 = math.exp %265 : vector<8x128xf32>
    %cst_64 = arith.constant 1.000000e+00 : f32
    %267 = vector.broadcast %cst_64 : f32 to vector<8x128xf32>
    %268 = arith.addf %267, %266 : vector<8x128xf32>
    %269 = arith.divf %267, %268 : vector<8x128xf32>
    %270 = vector.extract_strided_slice %257 {offsets = [0, 256], sizes = [8, 128], strides = [1, 1]} : vector<8x512xf32> to vector<8x128xf32>
    %271 = math.tanh %270 : vector<8x128xf32>
    %272 = vector.extract_strided_slice %257 {offsets = [0, 384], sizes = [8, 128], strides = [1, 1]} : vector<8x512xf32> to vector<8x128xf32>
    %273 = arith.negf %272 : vector<8x128xf32>
    %274 = math.exp %273 : vector<8x128xf32>
    %cst_65 = arith.constant 1.000000e+00 : f32
    %275 = vector.broadcast %cst_65 : f32 to vector<8x128xf32>
    %276 = arith.addf %275, %274 : vector<8x128xf32>
    %277 = arith.divf %275, %276 : vector<8x128xf32>
    %278 = arith.mulf %269, %253 : vector<8x128xf32>
    %279 = arith.mulf %263, %271 : vector<8x128xf32>
    %280 = arith.addf %278, %279 : vector<8x128xf32>
    %281 = math.tanh %280 : vector<8x128xf32>
    %282 = arith.mulf %277, %281 : vector<8x128xf32>
    %c7_66 = arith.constant 7 : index
    %c0_67 = arith.constant 0 : index
    %c0_68 = arith.constant 0 : index
    %283 = vector.load %arg1[%c7_66, %c0_67, %c0_68] : memref<8x8x1xf32, #tpu.memory_space<vmem>>, vector<1x8x1xf32>
    %284 = vector.shape_cast %283 : vector<1x8x1xf32> to vector<8x1xf32>
    %285 = vector.broadcast %284 : vector<8x1xf32> to vector<8x128xf32>
    %286 = arith.mulf %285, %282 : vector<8x128xf32>
    %cst_69 = arith.constant 1.000000e+00 : f32
    %287 = vector.broadcast %cst_69 : f32 to vector<8x1xf32>
    %288 = arith.subf %287, %284 : vector<8x1xf32>
    %289 = vector.broadcast %288 : vector<8x1xf32> to vector<8x128xf32>
    %290 = arith.mulf %289, %246 : vector<8x128xf32>
    %291 = arith.addf %286, %290 : vector<8x128xf32>
    %292 = vector.extract_strided_slice %291 {offsets = [0, 0], sizes = [2, 128], strides = [1, 1]} : vector<8x128xf32> to vector<2x128xf32>
    %293 = vector.extract_strided_slice %291 {offsets = [2, 0], sizes = [2, 128], strides = [1, 1]} : vector<8x128xf32> to vector<2x128xf32>
    %294 = vector.extract_strided_slice %291 {offsets = [4, 0], sizes = [2, 128], strides = [1, 1]} : vector<8x128xf32> to vector<2x128xf32>
    %c0_70 = arith.constant 0 : index
    %c0_71 = arith.constant 0 : index
    %295 = vector.load %arg3[%c0_70, %c0_71] : memref<384x256xf32, #tpu.memory_space<vmem>>, vector<128x256xf32>
    %cst_72 = arith.constant dense<0.000000e+00> : vector<2x256xf32>
    %296 = tpu.matmul %292, %295, %cst_72 {dimension_numbers = #tpu.dot_dimension_numbers<[1], [0], [0], [1], [0, 0, 1, 1], [], []>} : vector<2x128xf32>, vector<128x256xf32>, vector<2x256xf32> -> vector<2x256xf32>
    %c128 = arith.constant 128 : index
    %c0_73 = arith.constant 0 : index
    %297 = vector.load %arg3[%c128, %c0_73] : memref<384x256xf32, #tpu.memory_space<vmem>>, vector<128x256xf32>
    %cst_74 = arith.constant dense<0.000000e+00> : vector<2x256xf32>
    %298 = tpu.matmul %293, %297, %cst_74 {dimension_numbers = #tpu.dot_dimension_numbers<[1], [0], [0], [1], [0, 0, 1, 1], [], []>} : vector<2x128xf32>, vector<128x256xf32>, vector<2x256xf32> -> vector<2x256xf32>
    %299 = arith.addf %296, %298 : vector<2x256xf32>
    %c256 = arith.constant 256 : index
    %c0_75 = arith.constant 0 : index
    %300 = vector.load %arg3[%c256, %c0_75] : memref<384x256xf32, #tpu.memory_space<vmem>>, vector<128x256xf32>
    %cst_76 = arith.constant dense<0.000000e+00> : vector<2x256xf32>
    %301 = tpu.matmul %294, %300, %cst_76 {dimension_numbers = #tpu.dot_dimension_numbers<[1], [0], [0], [1], [0, 0, 1, 1], [], []>} : vector<2x128xf32>, vector<128x256xf32>, vector<2x256xf32> -> vector<2x256xf32>
    %302 = arith.addf %299, %301 : vector<2x256xf32>
    %c0_77 = arith.constant 0 : index
    %c0_78 = arith.constant 0 : index
    %303 = vector.load %arg9[%c0_77, %c0_78] : memref<2x1xf32, #tpu.memory_space<vmem>>, vector<2x1xf32>
    %c0_79 = arith.constant 0 : index
    %c0_80 = arith.constant 0 : index
    %304 = vector.load %arg4[%c0_79, %c0_80] : memref<1x256xf32, #tpu.memory_space<vmem>>, vector<1x256xf32>
    %305 = vector.broadcast %303 : vector<2x1xf32> to vector<2x256xf32>
    %306 = vector.broadcast %304 : vector<1x256xf32> to vector<2x256xf32>
    %307 = arith.mulf %305, %306 : vector<2x256xf32>
    %308 = arith.addf %302, %307 : vector<2x256xf32>
    %c0_81 = arith.constant 0 : index
    %c0_82 = arith.constant 0 : index
    %309 = vector.load %arg10[%c0_81, %c0_82] : memref<2x1xf32, #tpu.memory_space<vmem>>, vector<2x1xf32>
    %c0_83 = arith.constant 0 : index
    %c0_84 = arith.constant 0 : index
    %310 = vector.load %arg5[%c0_83, %c0_84] : memref<1x256xf32, #tpu.memory_space<vmem>>, vector<1x256xf32>
    %311 = vector.broadcast %309 : vector<2x1xf32> to vector<2x256xf32>
    %312 = vector.broadcast %310 : vector<1x256xf32> to vector<2x256xf32>
    %313 = arith.mulf %311, %312 : vector<2x256xf32>
    %314 = arith.addf %308, %313 : vector<2x256xf32>
    %c0_85 = arith.constant 0 : index
    %c0_86 = arith.constant 0 : index
    %315 = vector.load %arg6[%c0_85, %c0_86] : memref<1x256xf32, #tpu.memory_space<vmem>>, vector<1x256xf32>
    %316 = vector.broadcast %315 : vector<1x256xf32> to vector<2x256xf32>
    %317 = arith.addf %314, %316 : vector<2x256xf32>
    %cst_87 = arith.constant 0.000000e+00 : f32
    %318 = vector.broadcast %cst_87 : f32 to vector<2x256xf32>
    %319 = arith.maximumf %317, %318 : vector<2x256xf32>
    %c0_88 = arith.constant 0 : index
    %c0_89 = arith.constant 0 : index
    %320 = vector.load %arg7[%c0_88, %c0_89] : memref<256x128xf32, #tpu.memory_space<vmem>>, vector<256x128xf32>
    %cst_90 = arith.constant dense<0.000000e+00> : vector<2x128xf32>
    %321 = tpu.matmul %319, %320, %cst_90 {dimension_numbers = #tpu.dot_dimension_numbers<[1], [0], [0], [1], [0, 0, 1, 1], [], []>} : vector<2x256xf32>, vector<256x128xf32>, vector<2x128xf32> -> vector<2x128xf32>
    %c0_91 = arith.constant 0 : index
    %c0_92 = arith.constant 0 : index
    %322 = vector.load %arg8[%c0_91, %c0_92] : memref<1x128xf32, #tpu.memory_space<vmem>>, vector<1x128xf32>
    %323 = vector.broadcast %322 : vector<1x128xf32> to vector<2x128xf32>
    %324 = arith.addf %321, %323 : vector<2x128xf32>
    %c0_93 = arith.constant 0 : index
    %c0_94 = arith.constant 0 : index
    %325 = vector.load %arg11[%c0_93, %c0_94] : memref<2x128xf32, #tpu.memory_space<vmem>>, vector<2x128xf32>
    tpu.vector_store %arg11[%c0_93, %c0_94], %324 {strides = array<i32>} : memref<2x128xf32, #tpu.memory_space<vmem>>, vector<2x128xf32>,
    return
  }
}

</mosaic_0001>

<llo_original>
// kernel: lstm_model_forward.1
$region0: #{lstm_model_forward.1}
  #allocation0 [shape = 'u32[]', space=smem, size = 0x4, offset = 0x4, fixed_abs, tag = 'smem constant byte address 0x4 - core index']
  #allocation1 [shape = 'u32[72,128]{1,0:T(1,128)}', space=vmem, size = 0x9000, scoped, tag = 'internal scratch']
  %s0 = inlined_call_operand.vmem [shape: f32[8,8,512], index: 0, kind: input, shape index: {}]
  %s1 = inlined_call_operand.vmem [shape: f32[8,8,1], index: 1, kind: input, shape index: {}]
  %s2 = inlined_call_operand.vmem [shape: f32[128,512], index: 2, kind: input, shape index: {}]
  %s3 = inlined_call_operand.vmem [shape: f32[384,256], index: 3, kind: input, shape index: {}]
  %s4 = inlined_call_operand.vmem [shape: f32[1,256], index: 4, kind: input, shape index: {}]
  %s5 = inlined_call_operand.vmem [shape: f32[1,256], index: 5, kind: input, shape index: {}]
  %s6 = inlined_call_operand.vmem [shape: f32[1,256], index: 6, kind: input, shape index: {}]
  %s7 = inlined_call_operand.vmem [shape: f32[256,128], index: 7, kind: input, shape index: {}]
  %s8 = inlined_call_operand.vmem [shape: f32[1,128], index: 8, kind: input, shape index: {}]
  %s9 = inlined_call_operand.vmem [shape: f32[2,1], index: 9, kind: input, shape index: {}]
  %s10 = inlined_call_operand.vmem [shape: f32[2,1], index: 10, kind: input, shape index: {}]
  %s11 = inlined_call_operand.hbm [shape: f32[2,128], index: 11, kind: output, shape index: {}]
  %s12 = sld [smem:[#allocation0]]
  $region54: #{lstm_model_forward.1} parent=0
    _
  %s14 = ssub.s32 1, %s12
  %s15 = scalar_select 0, %s14, %s12
  $region1: #{lstm_model_forward.1} parent=0
    #allocation2 [shape = 'u8[1024]{0}', space=vmem, size = 0x400, scoped, tag = 'output window, operand 0, single buffered']
    #allocation3 [shape = 's32[1]{0}', space=sflag, size = 0x4, scoped, tag = 'scoped memory for lstm_model_forward.1']
    %16 = vsyncpa [#allocation3], 0
    // Predicated region
    $region2: #{lstm_model_forward.1} parent=1 // pred_check
      _
    $region3: #{lstm_model_forward.1} parent=1 // pred_check_branch
      %18 = sbr.rel (0) target = $region5
    $region4: #{lstm_model_forward.1} parent=1 // pred_region
      _
    $region5: #{lstm_model_forward.1} parent=1 // pred_fallthru
      _
    // Predicated region
    $region6: #{lstm_model_forward.1} parent=1 // pred_check
      _
    $region7: #{lstm_model_forward.1} parent=1 // pred_check_branch
      %20 = sbr.rel (0) target = $region9
    $region8: #{lstm_model_forward.1} parent=1 // pred_region
      _
    $region9: #{lstm_model_forward.1} parent=1 // pred_fallthru
      _
    // Predicated region
    $region10: #{lstm_model_forward.1} parent=1 // pred_check
      _
    $region11: #{lstm_model_forward.1} parent=1 // pred_check_branch
      %22 = sbr.rel (0) target = $region13
    $region12: #{lstm_model_forward.1} parent=1 // pred_region
      _
    $region13: #{lstm_model_forward.1} parent=1 // pred_fallthru
      _
    // Predicated region
    $region14: #{lstm_model_forward.1} parent=1 // pred_check
      _
    $region15: #{lstm_model_forward.1} parent=1 // pred_check_branch
      %24 = sbr.rel (0) target = $region17
    $region16: #{lstm_model_forward.1} parent=1 // pred_region
      _
    $region17: #{lstm_model_forward.1} parent=1 // pred_fallthru
      _
    // Predicated region
    $region18: #{lstm_model_forward.1} parent=1 // pred_check
      _
    $region19: #{lstm_model_forward.1} parent=1 // pred_check_branch
      %26 = sbr.rel (0) target = $region21
    $region20: #{lstm_model_forward.1} parent=1 // pred_region
      _
    $region21: #{lstm_model_forward.1} parent=1 // pred_fallthru
      _
    // Predicated region
    $region22: #{lstm_model_forward.1} parent=1 // pred_check
      _
    $region23: #{lstm_model_forward.1} parent=1 // pred_check_branch
      %28 = sbr.rel (0) target = $region25
    $region24: #{lstm_model_forward.1} parent=1 // pred_region
      _
    $region25: #{lstm_model_forward.1} parent=1 // pred_fallthru
      _
    // Predicated region
    $region26: #{lstm_model_forward.1} parent=1 // pred_check
      _
    $region27: #{lstm_model_forward.1} parent=1 // pred_check_branch
      %30 = sbr.rel (0) target = $region29
    $region28: #{lstm_model_forward.1} parent=1 // pred_region
      _
    $region29: #{lstm_model_forward.1} parent=1 // pred_fallthru
      _
    // Predicated region
    $region30: #{lstm_model_forward.1} parent=1 // pred_check
      _
    $region31: #{lstm_model_forward.1} parent=1 // pred_check_branch
      %32 = sbr.rel (0) target = $region33
    $region32: #{lstm_model_forward.1} parent=1 // pred_region
      _
    $region33: #{lstm_model_forward.1} parent=1 // pred_fallthru
      _
    // Predicated region
    $region34: #{lstm_model_forward.1} parent=1 // pred_check
      _
    $region35: #{lstm_model_forward.1} parent=1 // pred_check_branch
      %34 = sbr.rel (0) target = $region37
    $region36: #{lstm_model_forward.1} parent=1 // pred_region
      _
    $region37: #{lstm_model_forward.1} parent=1 // pred_fallthru
      _
    // Predicated region
    $region38: #{lstm_model_forward.1} parent=1 // pred_check
      _
    $region39: #{lstm_model_forward.1} parent=1 // pred_check_branch
      %36 = sbr.rel (0) target = $region41
    $region40: #{lstm_model_forward.1} parent=1 // pred_region
      _
    $region41: #{lstm_model_forward.1} parent=1 // pred_fallthru
      _
    // Predicated region
    $region42: #{lstm_model_forward.1} parent=1 // pred_check
      _
    $region43: #{lstm_model_forward.1} parent=1 // pred_check_branch
      %38 = sbr.rel (0) target = $region45
    $region44: #{lstm_model_forward.1} parent=1 // pred_region
      _
    $region45: #{lstm_model_forward.1} parent=1 // pred_fallthru
      _
    %v39 = vld [vmem:[%s2] sm:$0xff]
    %v40 = vld [vmem:[%s2 + $0x8] sm:$0xff]
    %v41 = vld [vmem:[%s2 + $0x10] sm:$0xff]
    %v42 = vld [vmem:[%s2 + $0x18] sm:$0xff]
    %v43 = vld [vmem:[%s2 + $0x20] sm:$0xff]
    %v44 = vld [vmem:[%s2 + $0x28] sm:$0xff]
    %v45 = vld [vmem:[%s2 + $0x30] sm:$0xff]
    %v46 = vld [vmem:[%s2 + $0x38] sm:$0xff]
    %v47 = vld [vmem:[%s2 + $0x40] sm:$0xff]
    %v48 = vld [vmem:[%s2 + $0x48] sm:$0xff]
    %v49 = vld [vmem:[%s2 + $0x50] sm:$0xff]
    %v50 = vld [vmem:[%s2 + $0x58] sm:$0xff]
    %v51 = vld [vmem:[%s2 + $0x60] sm:$0xff]
    %v52 = vld [vmem:[%s2 + $0x68] sm:$0xff]
    %v53 = vld [vmem:[%s2 + $0x70] sm:$0xff]
    %v54 = vld [vmem:[%s2 + $0x78] sm:$0xff]
    %v55 = vld [vmem:[%s2 + $0x80] sm:$0xff]
    %v56 = vld [vmem:[%s2 + $0x88] sm:$0xff]
    %v57 = vld [vmem:[%s2 + $0x90] sm:$0xff]
    %v58 = vld [vmem:[%s2 + $0x98] sm:$0xff]
    %v59 = vld [vmem:[%s2 + $0xa0] sm:$0xff]
    %v60 = vld [vmem:[%s2 + $0xa8] sm:$0xff]
    %v61 = vld [vmem:[%s2 + $0xb0] sm:$0xff]
    %v62 = vld [vmem:[%s2 + $0xb8] sm:$0xff]
    %v63 = vld [vmem:[%s2 + $0xc0] sm:$0xff]
    %v64 = vld [vmem:[%s2 + $0xc8] sm:$0xff]
    %v65 = vld [vmem:[%s2 + $0xd0] sm:$0xff]
    %v66 = vld [vmem:[%s2 + $0xd8] sm:$0xff]
    %v67 = vld [vmem:[%s2 + $0xe0] sm:$0xff]
    %v68 = vld [vmem:[%s2 + $0xe8] sm:$0xff]
    %v69 = vld [vmem:[%s2 + $0xf0] sm:$0xff]
    %v70 = vld [vmem:[%s2 + $0xf8] sm:$0xff]
    %v71 = vld [vmem:[%s2 + $0x100] sm:$0xff]
    %v72 = vld [vmem:[%s2 + $0x108] sm:$0xff]
    %v73 = vld [vmem:[%s2 + $0x110] sm:$0xff]
    %v74 = vld [vmem:[%s2 + $0x118] sm:$0xff]
    %v75 = vld [vmem:[%s2 + $0x120] sm:$0xff]
    %v76 = vld [vmem:[%s2 + $0x128] sm:$0xff]
    %v77 = vld [vmem:[%s2 + $0x130] sm:$0xff]
    %v78 = vld [vmem:[%s2 + $0x138] sm:$0xff]
    %v79 = vld [vmem:[%s2 + $0x140] sm:$0xff]
    %v80 = vld [vmem:[%s2 + $0x148] sm:$0xff]
    %v81 = vld [vmem:[%s2 + $0x150] sm:$0xff]
    %v82 = vld [vmem:[%s2 + $0x158] sm:$0xff]
    %v83 = vld [vmem:[%s2 + $0x160] sm:$0xff]
    %v84 = vld [vmem:[%s2 + $0x168] sm:$0xff]
    %v85 = vld [vmem:[%s2 + $0x170] sm:$0xff]
    %v86 = vld [vmem:[%s2 + $0x178] sm:$0xff]
    %v87 = vld [vmem:[%s2 + $0x180] sm:$0xff]
    %v88 = vld [vmem:[%s2 + $0x188] sm:$0xff]
    %v89 = vld [vmem:[%s2 + $0x190] sm:$0xff]
    %v90 = vld [vmem:[%s2 + $0x198] sm:$0xff]
    %v91 = vld [vmem:[%s2 + $0x1a0] sm:$0xff]
    %v92 = vld [vmem:[%s2 + $0x1a8] sm:$0xff]
    %v93 = vld [vmem:[%s2 + $0x1b0] sm:$0xff]
    %v94 = vld [vmem:[%s2 + $0x1b8] sm:$0xff]
    %v95 = vld [vmem:[%s2 + $0x1c0] sm:$0xff]
    %v96 = vld [vmem:[%s2 + $0x1c8] sm:$0xff]
    %v97 = vld [vmem:[%s2 + $0x1d0] sm:$0xff]
    %v98 = vld [vmem:[%s2 + $0x1d8] sm:$0xff]
    %v99 = vld [vmem:[%s2 + $0x1e0] sm:$0xff]
    %v100 = vld [vmem:[%s2 + $0x1e8] sm:$0xff]
    %v101 = vld [vmem:[%s2 + $0x1f0] sm:$0xff]
    %v102 = vld [vmem:[%s2 + $0x1f8] sm:$0xff]
    %v103 = vld [vmem:[%s0] sm:$0xff]
    %v104 = vld [vmem:[%s0 + $0x8] sm:$0xff]
    %v105 = vld [vmem:[%s0 + $0x10] sm:$0xff]
    %v106 = vld [vmem:[%s0 + $0x18] sm:$0xff]
    %107 = vmatpush.msra.mxu0 %v99
    %108 = vmatpush.msra.mxu0 %v95
    %109 = vmatpush.msra.mxu0 %v91
    %110 = vmatpush.msra.mxu0 %v87
    %111 = vmatpush.msra.mxu0 %v83
    %112 = vmatpush.msra.mxu0 %v79
    %113 = vmatpush.msra.mxu0 %v75
    %114 = vmatpush.msra.mxu0 %v71
    %115 = vmatpush.msra.mxu0 %v67
    %116 = vmatpush.msra.mxu0 %v63
    %117 = vmatpush.msra.mxu0 %v59
    %118 = vmatpush.msra.mxu0 %v55
    %119 = vmatpush.msra.mxu0 %v51
    %120 = vmatpush.msra.mxu0 %v47
    %121 = vmatpush.msra.mxu0 %v43
    %122 = vmatpush.msra.mxu0 %v39
    %123 = vmatmul.f32.gmra.mxu0 0.0
    %v124 = vpop.f32.mrf.mxu0
    %v125 = vadd.f32 0.0, %v124
    %126 = vdwg.mxu0
    %127 = vmatpush.msra.mxu0 %v100
    %128 = vmatpush.msra.mxu0 %v96
    %129 = vmatpush.msra.mxu0 %v92
    %130 = vmatpush.msra.mxu0 %v88
    %131 = vmatpush.msra.mxu0 %v84
    %132 = vmatpush.msra.mxu0 %v80
    %133 = vmatpush.msra.mxu0 %v76
    %134 = vmatpush.msra.mxu0 %v72
    %135 = vmatpush.msra.mxu0 %v68
    %136 = vmatpush.msra.mxu0 %v64
    %137 = vmatpush.msra.mxu0 %v60
    %138 = vmatpush.msra.mxu0 %v56
    %139 = vmatpush.msra.mxu0 %v52
    %140 = vmatpush.msra.mxu0 %v48
    %141 = vmatpush.msra.mxu0 %v44
    %142 = vmatpush.msra.mxu0 %v40
    %143 = vmatmul.f32.gmra.mxu0 0.0
    %v144 = vpop.f32.mrf.mxu0
    %v145 = vadd.f32 0.0, %v144
    %146 = vdwg.mxu0
    %147 = vmatpush.msra.mxu0 %v101
    %148 = vmatpush.msra.mxu0 %v97
    %149 = vmatpush.msra.mxu0 %v93
    %150 = vmatpush.msra.mxu0 %v89
    %151 = vmatpush.msra.mxu0 %v85
    %152 = vmatpush.msra.mxu0 %v81
    %153 = vmatpush.msra.mxu0 %v77
    %154 = vmatpush.msra.mxu0 %v73
    %155 = vmatpush.msra.mxu0 %v69
    %156 = vmatpush.msra.mxu0 %v65
    %157 = vmatpush.msra.mxu0 %v61
    %158 = vmatpush.msra.mxu0 %v57
    %159 = vmatpush.msra.mxu0 %v53
    %160 = vmatpush.msra.mxu0 %v49
    %161 = vmatpush.msra.mxu0 %v45
    %162 = vmatpush.msra.mxu0 %v41
    %163 = vmatmul.f32.gmra.mxu0 0.0
    %v164 = vpop.f32.mrf.mxu0
    %v165 = vadd.f32 0.0, %v164
    %166 = vdwg.mxu0
    %167 = vmatpush.msra.mxu0 %v102
    %168 = vmatpush.msra.mxu0 %v98
    %169 = vmatpush.msra.mxu0 %v94
    %170 = vmatpush.msra.mxu0 %v90
    %171 = vmatpush.msra.mxu0 %v86
    %172 = vmatpush.msra.mxu0 %v82
    %173 = vmatpush.msra.mxu0 %v78
    %174 = vmatpush.msra.mxu0 %v74
    %175 = vmatpush.msra.mxu0 %v70
    %176 = vmatpush.msra.mxu0 %v66
    %177 = vmatpush.msra.mxu0 %v62
    %178 = vmatpush.msra.mxu0 %v58
    %179 = vmatpush.msra.mxu0 %v54
    %180 = vmatpush.msra.mxu0 %v50
    %181 = vmatpush.msra.mxu0 %v46
    %182 = vmatpush.msra.mxu0 %v42
    %183 = vmatmul.f32.gmra.mxu0 0.0
    %v184 = vpop.f32.mrf.mxu0
    %v185 = vadd.f32 0.0, %v184
    %186 = vdwg.mxu0
    %v187 = vadd.f32 %v103, %v125
    %v188 = vadd.f32 %v104, %v145
    %v189 = vadd.f32 %v105, %v165
    %v190 = vadd.f32 %v106, %v185
    %v191 = vxor.u32 %v187, 2147483648
    %v192 = vmul.f32 %v191, 1.442695
    %v193 = vpow.pop %v192
    %v194 = vadd.f32 %v193, 1.0
    %v195 = vrcp.pop %v194
    %v196 = vmul.f32 %v194, %v195
    %v197 = vsub.f32 1.0, %v196
    %v198 = vmul.f32 %v195, %v197
    %v199 = vadd.f32 %v195, %v198
    %vm200 = vweird.f32 %v194
    %vm201 = vweird.f32 %v195
    %vm202 = vmor %vm200, %vm201
    %v203 = vsel %vm202, %v195, %v199
    %v204 = vand.u32 2147483647, %v194
    %vm205 = vcmp.eq.f32.partialorder %v204, 8.507059e+37
    %v206 = vand.u32 %v194, 2147483648
    %v207 = vor.u32 1.1754944e-38, %v206
    %v208 = vsel %vm205, %v207, %v203
    %v209 = vmul.f32 1.0, %v208
    %v210 = vxor.u32 %v188, 2147483648
    %v211 = vmul.f32 %v210, 1.442695
    %v212 = vpow.pop %v211
    %v213 = vadd.f32 %v212, 1.0
    %v214 = vrcp.pop %v213
    %v215 = vmul.f32 %v213, %v214
    %v216 = vsub.f32 1.0, %v215
    %v217 = vmul.f32 %v214, %v216
    %v218 = vadd.f32 %v214, %v217
    %vm219 = vweird.f32 %v213
    %vm220 = vweird.f32 %v214
    %vm221 = vmor %vm219, %vm220
    %v222 = vsel %vm221, %v214, %v218
    %v223 = vand.u32 2147483647, %v213
    %vm224 = vcmp.eq.f32.partialorder %v223, 8.507059e+37
    %v225 = vand.u32 %v213, 2147483648
    %v226 = vor.u32 1.1754944e-38, %v225
    %v227 = vsel %vm224, %v226, %v222
    %v228 = vmul.f32 1.0, %v227
    %v229 = vtanh.pop %v189
    %v230 = vxor.u32 %v190, 2147483648
    %v231 = vmul.f32 %v230, 1.442695
    %v232 = vpow.pop %v231
    %v233 = vadd.f32 %v232, 1.0
    %v234 = vrcp.pop %v233
    %v235 = vmul.f32 %v233, %v234
    %v236 = vsub.f32 1.0, %v235
    %v237 = vmul.f32 %v234, %v236
    %v238 = vadd.f32 %v234, %v237
    %vm239 = vweird.f32 %v233
    %vm240 = vweird.f32 %v234
    %vm241 = vmor %vm239, %vm240
    %v242 = vsel %vm241, %v234, %v238
    %v243 = vand.u32 2147483647, %v233
    %vm244 = vcmp.eq.f32.partialorder %v243, 8.507059e+37
    %v245 = vand.u32 %v233, 2147483648
    %v246 = vor.u32 1.1754944e-38, %v245
    %v247 = vsel %vm244, %v246, %v242
    %v248 = vmul.f32 1.0, %v247
    %v249 = vmul.f32 %v228, 0.0
    %v250 = vmul.f32 %v209, %v229
    %v251 = vadd.f32 %v249, %v250
    %v252 = vtanh.pop %v251
    %v253 = vmul.f32 %v248, %v252
    %s254 = scalar_lea.vmem %s0, 32
    %v255 = vld [vmem:[%s254] sm:$0xff]
    %v256 = vld [vmem:[%s254 + $0x8] sm:$0xff]
    %v257 = vld [vmem:[%s254 + $0x10] sm:$0xff]
    %v258 = vld [vmem:[%s254 + $0x18] sm:$0xff]
    %259 = vmatpush.msra.mxu0 %v99
    %260 = vmatpush.msra.mxu0 %v95
    %261 = vmatpush.msra.mxu0 %v91
    %262 = vmatpush.msra.mxu0 %v87
    %263 = vmatpush.msra.mxu0 %v83
    %264 = vmatpush.msra.mxu0 %v79
    %265 = vmatpush.msra.mxu0 %v75
    %266 = vmatpush.msra.mxu0 %v71
    %267 = vmatpush.msra.mxu0 %v67
    %268 = vmatpush.msra.mxu0 %v63
    %269 = vmatpush.msra.mxu0 %v59
    %270 = vmatpush.msra.mxu0 %v55
    %271 = vmatpush.msra.mxu0 %v51
    %272 = vmatpush.msra.mxu0 %v47
    %273 = vmatpush.msra.mxu0 %v43
    %274 = vmatpush.msra.mxu0 %v39
    %275 = vmatmul.f32.gmra.mxu0 %v253
    %v276 = vpop.f32.mrf.mxu0
    %v277 = vadd.f32 0.0, %v276
    %278 = vdwg.mxu0
    %279 = vmatpush.msra.mxu0 %v100
    %280 = vmatpush.msra.mxu0 %v96
    %281 = vmatpush.msra.mxu0 %v92
    %282 = vmatpush.msra.mxu0 %v88
    %283 = vmatpush.msra.mxu0 %v84
    %284 = vmatpush.msra.mxu0 %v80
    %285 = vmatpush.msra.mxu0 %v76
    %286 = vmatpush.msra.mxu0 %v72
    %287 = vmatpush.msra.mxu0 %v68
    %288 = vmatpush.msra.mxu0 %v64
    %289 = vmatpush.msra.mxu0 %v60
    %290 = vmatpush.msra.mxu0 %v56
    %291 = vmatpush.msra.mxu0 %v52
    %292 = vmatpush.msra.mxu0 %v48
    %293 = vmatpush.msra.mxu0 %v44
    %294 = vmatpush.msra.mxu0 %v40
    %295 = vmatmul.f32.gmra.mxu0 %v253
    %v296 = vpop.f32.mrf.mxu0
    %v297 = vadd.f32 0.0, %v296
    %298 = vdwg.mxu0
    %299 = vmatpush.msra.mxu0 %v101
    %300 = vmatpush.msra.mxu0 %v97
    %301 = vmatpush.msra.mxu0 %v93
    %302 = vmatpush.msra.mxu0 %v89
    %303 = vmatpush.msra.mxu0 %v85
    %304 = vmatpush.msra.mxu0 %v81
    %305 = vmatpush.msra.mxu0 %v77
    %306 = vmatpush.msra.mxu0 %v73
    %307 = vmatpush.msra.mxu0 %v69
    %308 = vmatpush.msra.mxu0 %v65
    %309 = vmatpush.msra.mxu0 %v61
    %310 = vmatpush.msra.mxu0 %v57
    %311 = vmatpush.msra.mxu0 %v53
    %312 = vmatpush.msra.mxu0 %v49
    %313 = vmatpush.msra.mxu0 %v45
    %314 = vmatpush.msra.mxu0 %v41
    %315 = vmatmul.f32.gmra.mxu0 %v253
    %v316 = vpop.f32.mrf.mxu0
    %v317 = vadd.f32 0.0, %v316
    %318 = vdwg.mxu0
    %319 = vmatpush.msra.mxu0 %v102
    %320 = vmatpush.msra.mxu0 %v98
    %321 = vmatpush.msra.mxu0 %v94
    %322 = vmatpush.msra.mxu0 %v90
    %323 = vmatpush.msra.mxu0 %v86
    %324 = vmatpush.msra.mxu0 %v82
    %325 = vmatpush.msra.mxu0 %v78
    %326 = vmatpush.msra.mxu0 %v74
    %327 = vmatpush.msra.mxu0 %v70
    %328 = vmatpush.msra.mxu0 %v66
    %329 = vmatpush.msra.mxu0 %v62
    %330 = vmatpush.msra.mxu0 %v58
    %331 = vmatpush.msra.mxu0 %v54
    %332 = vmatpush.msra.mxu0 %v50
    %333 = vmatpush.msra.mxu0 %v46
    %334 = vmatpush.msra.mxu0 %v42
    %335 = vmatmul.f32.gmra.mxu0 %v253
    %v336 = vpop.f32.mrf.mxu0
    %v337 = vadd.f32 0.0, %v336
    %338 = vdwg.mxu0
    %v339 = vadd.f32 %v255, %v277
    %v340 = vadd.f32 %v256, %v297
    %v341 = vadd.f32 %v257, %v317
    %v342 = vadd.f32 %v258, %v337
    %v343 = vxor.u32 %v339, 2147483648
    %v344 = vmul.f32 %v343, 1.442695
    %v345 = vpow.pop %v344
    %v346 = vadd.f32 %v345, 1.0
    %v347 = vrcp.pop %v346
    %v348 = vmul.f32 %v346, %v347
    %v349 = vsub.f32 1.0, %v348
    %v350 = vmul.f32 %v347, %v349
    %v351 = vadd.f32 %v347, %v350
    %vm352 = vweird.f32 %v346
    %vm353 = vweird.f32 %v347
    %vm354 = vmor %vm352, %vm353
    %v355 = vsel %vm354, %v347, %v351
    %v356 = vand.u32 2147483647, %v346
    %vm357 = vcmp.eq.f32.partialorder %v356, 8.507059e+37
    %v358 = vand.u32 %v346, 2147483648
    %v359 = vor.u32 1.1754944e-38, %v358
    %v360 = vsel %vm357, %v359, %v355
    %v361 = vmul.f32 1.0, %v360
    %v362 = vxor.u32 %v340, 2147483648
    %v363 = vmul.f32 %v362, 1.442695
    %v364 = vpow.pop %v363
    %v365 = vadd.f32 %v364, 1.0
    %v366 = vrcp.pop %v365
    %v367 = vmul.f32 %v365, %v366
    %v368 = vsub.f32 1.0, %v367
    %v369 = vmul.f32 %v366, %v368
    %v370 = vadd.f32 %v366, %v369
    %vm371 = vweird.f32 %v365
    %vm372 = vweird.f32 %v366
    %vm373 = vmor %vm371, %vm372
    %v374 = vsel %vm373, %v366, %v370
    %v375 = vand.u32 2147483647, %v365
    %vm376 = vcmp.eq.f32.partialorder %v375, 8.507059e+37
    %v377 = vand.u32 %v365, 2147483648
    %v378 = vor.u32 1.1754944e-38, %v377
    %v379 = vsel %vm376, %v378, %v374
    %v380 = vmul.f32 1.0, %v379
    %v381 = vtanh.pop %v341
    %v382 = vxor.u32 %v342, 2147483648
    %v383 = vmul.f32 %v382, 1.442695
    %v384 = vpow.pop %v383
    %v385 = vadd.f32 %v384, 1.0
    %v386 = vrcp.pop %v385
    %v387 = vmul.f32 %v385, %v386
    %v388 = vsub.f32 1.0, %v387
    %v389 = vmul.f32 %v386, %v388
    %v390 = vadd.f32 %v386, %v389
    %vm391 = vweird.f32 %v385
    %vm392 = vweird.f32 %v386
    %vm393 = vmor %vm391, %vm392
    %v394 = vsel %vm393, %v386, %v390
    %v395 = vand.u32 2147483647, %v385
    %vm396 = vcmp.eq.f32.partialorder %v395, 8.507059e+37
    %v397 = vand.u32 %v385, 2147483648
    %v398 = vor.u32 1.1754944e-38, %v397
    %v399 = vsel %vm396, %v398, %v394
    %v400 = vmul.f32 1.0, %v399
    %v401 = vmul.f32 %v380, %v251
    %v402 = vmul.f32 %v361, %v381
    %v403 = vadd.f32 %v401, %v402
    %v404 = vtanh.pop %v403
    %v405 = vmul.f32 %v400, %v404
    %s406 = scalar_lea.vmem %s0, 64
    %v407 = vld [vmem:[%s406] sm:$0xff]
    %v408 = vld [vmem:[%s406 + $0x8] sm:$0xff]
    %v409 = vld [vmem:[%s406 + $0x10] sm:$0xff]
    %v410 = vld [vmem:[%s406 + $0x18] sm:$0xff]
    %411 = vmatpush.msra.mxu0 %v99
    %412 = vmatpush.msra.mxu0 %v95
    %413 = vmatpush.msra.mxu0 %v91
    %414 = vmatpush.msra.mxu0 %v87
    %415 = vmatpush.msra.mxu0 %v83
    %416 = vmatpush.msra.mxu0 %v79
    %417 = vmatpush.msra.mxu0 %v75
    %418 = vmatpush.msra.mxu0 %v71
    %419 = vmatpush.msra.mxu0 %v67
    %420 = vmatpush.msra.mxu0 %v63
    %421 = vmatpush.msra.mxu0 %v59
    %422 = vmatpush.msra.mxu0 %v55
    %423 = vmatpush.msra.mxu0 %v51
    %424 = vmatpush.msra.mxu0 %v47
    %425 = vmatpush.msra.mxu0 %v43
    %426 = vmatpush.msra.mxu0 %v39
    %427 = vmatmul.f32.gmra.mxu0 %v405
    %v428 = vpop.f32.mrf.mxu0
    %v429 = vadd.f32 0.0, %v428
    %430 = vdwg.mxu0
    %431 = vmatpush.msra.mxu0 %v100
    %432 = vmatpush.msra.mxu0 %v96
    %433 = vmatpush.msra.mxu0 %v92
    %434 = vmatpush.msra.mxu0 %v88
    %435 = vmatpush.msra.mxu0 %v84
    %436 = vmatpush.msra.mxu0 %v80
    %437 = vmatpush.msra.mxu0 %v76
    %438 = vmatpush.msra.mxu0 %v72
    %439 = vmatpush.msra.mxu0 %v68
    %440 = vmatpush.msra.mxu0 %v64
    %441 = vmatpush.msra.mxu0 %v60
    %442 = vmatpush.msra.mxu0 %v56
    %443 = vmatpush.msra.mxu0 %v52
    %444 = vmatpush.msra.mxu0 %v48
    %445 = vmatpush.msra.mxu0 %v44
    %446 = vmatpush.msra.mxu0 %v40
    %447 = vmatmul.f32.gmra.mxu0 %v405
    %v448 = vpop.f32.mrf.mxu0
    %v449 = vadd.f32 0.0, %v448
    %450 = vdwg.mxu0
    %451 = vmatpush.msra.mxu0 %v101
    %452 = vmatpush.msra.mxu0 %v97
    %453 = vmatpush.msra.mxu0 %v93
    %454 = vmatpush.msra.mxu0 %v89
    %455 = vmatpush.msra.mxu0 %v85
    %456 = vmatpush.msra.mxu0 %v81
    %457 = vmatpush.msra.mxu0 %v77
    %458 = vmatpush.msra.mxu0 %v73
    %459 = vmatpush.msra.mxu0 %v69
    %460 = vmatpush.msra.mxu0 %v65
    %461 = vmatpush.msra.mxu0 %v61
    %462 = vmatpush.msra.mxu0 %v57
    %463 = vmatpush.msra.mxu0 %v53
    %464 = vmatpush.msra.mxu0 %v49
    %465 = vmatpush.msra.mxu0 %v45
    %466 = vmatpush.msra.mxu0 %v41
    %467 = vmatmul.f32.gmra.mxu0 %v405
    %v468 = vpop.f32.mrf.mxu0
    %v469 = vadd.f32 0.0, %v468
    %470 = vdwg.mxu0
    %471 = vmatpush.msra.mxu0 %v102
    %472 = vmatpush.msra.mxu0 %v98
    %473 = vmatpush.msra.mxu0 %v94
    %474 = vmatpush.msra.mxu0 %v90
    %475 = vmatpush.msra.mxu0 %v86
    %476 = vmatpush.msra.mxu0 %v82
    %477 = vmatpush.msra.mxu0 %v78
    %478 = vmatpush.msra.mxu0 %v74
    %479 = vmatpush.msra.mxu0 %v70
    %480 = vmatpush.msra.mxu0 %v66
    %481 = vmatpush.msra.mxu0 %v62
    %482 = vmatpush.msra.mxu0 %v58
    %483 = vmatpush.msra.mxu0 %v54
    %484 = vmatpush.msra.mxu0 %v50
    %485 = vmatpush.msra.mxu0 %v46
    %486 = vmatpush.msra.mxu0 %v42
    %487 = vmatmul.f32.gmra.mxu0 %v405
    %v488 = vpop.f32.mrf.mxu0
    %v489 = vadd.f32 0.0, %v488
    %490 = vdwg.mxu0
    %v491 = vadd.f32 %v407, %v429
    %v492 = vadd.f32 %v408, %v449
    %v493 = vadd.f32 %v409, %v469
    %v494 = vadd.f32 %v410, %v489
    %v495 = vxor.u32 %v491, 2147483648
    %v496 = vmul.f32 %v495, 1.442695
    %v497 = vpow.pop %v496
    %v498 = vadd.f32 %v497, 1.0
    %v499 = vrcp.pop %v498
    %v500 = vmul.f32 %v498, %v499
    %v501 = vsub.f32 1.0, %v500
    %v502 = vmul.f32 %v499, %v501
    %v503 = vadd.f32 %v499, %v502
    %vm504 = vweird.f32 %v498
    %vm505 = vweird.f32 %v499
    %vm506 = vmor %vm504, %vm505
    %v507 = vsel %vm506, %v499, %v503
    %v508 = vand.u32 2147483647, %v498
    %vm509 = vcmp.eq.f32.partialorder %v508, 8.507059e+37
    %v510 = vand.u32 %v498, 2147483648
    %v511 = vor.u32 1.1754944e-38, %v510
    %v512 = vsel %vm509, %v511, %v507
    %v513 = vmul.f32 1.0, %v512
    %v514 = vxor.u32 %v492, 2147483648
    %v515 = vmul.f32 %v514, 1.442695
    %v516 = vpow.pop %v515
    %v517 = vadd.f32 %v516, 1.0
    %v518 = vrcp.pop %v517
    %v519 = vmul.f32 %v517, %v518
    %v520 = vsub.f32 1.0, %v519
    %v521 = vmul.f32 %v518, %v520
    %v522 = vadd.f32 %v518, %v521
    %vm523 = vweird.f32 %v517
    %vm524 = vweird.f32 %v518
    %vm525 = vmor %vm523, %vm524
    %v526 = vsel %vm525, %v518, %v522
    %v527 = vand.u32 2147483647, %v517
    %vm528 = vcmp.eq.f32.partialorder %v527, 8.507059e+37
    %v529 = vand.u32 %v517, 2147483648
    %v530 = vor.u32 1.1754944e-38, %v529
    %v531 = vsel %vm528, %v530, %v526
    %v532 = vmul.f32 1.0, %v531
    %v533 = vtanh.pop %v493
    %v534 = vxor.u32 %v494, 2147483648
    %v535 = vmul.f32 %v534, 1.442695
    %v536 = vpow.pop %v535
    %v537 = vadd.f32 %v536, 1.0
    %v538 = vrcp.pop %v537
    %v539 = vmul.f32 %v537, %v538
    %v540 = vsub.f32 1.0, %v539
    %v541 = vmul.f32 %v538, %v540
    %v542 = vadd.f32 %v538, %v541
    %vm543 = vweird.f32 %v537
    %vm544 = vweird.f32 %v538
    %vm545 = vmor %vm543, %vm544
    %v546 = vsel %vm545, %v538, %v542
    %v547 = vand.u32 2147483647, %v537
    %vm548 = vcmp.eq.f32.partialorder %v547, 8.507059e+37
    %v549 = vand.u32 %v537, 2147483648
    %v550 = vor.u32 1.1754944e-38, %v549
    %v551 = vsel %vm548, %v550, %v546
    %v552 = vmul.f32 1.0, %v551
    %v553 = vmul.f32 %v532, %v403
    %v554 = vmul.f32 %v513, %v533
    %v555 = vadd.f32 %v553, %v554
    %v556 = vtanh.pop %v555
    %v557 = vmul.f32 %v552, %v556
    %s558 = scalar_lea.vmem %s0, 96
    %v559 = vld [vmem:[%s558] sm:$0xff]
    %v560 = vld [vmem:[%s558 + $0x8] sm:$0xff]
    %v561 = vld [vmem:[%s558 + $0x10] sm:$0xff]
    %v562 = vld [vmem:[%s558 + $0x18] sm:$0xff]
    %563 = vmatpush.msra.mxu0 %v99
    %564 = vmatpush.msra.mxu0 %v95
    %565 = vmatpush.msra.mxu0 %v91
    %566 = vmatpush.msra.mxu0 %v87
    %567 = vmatpush.msra.mxu0 %v83
    %568 = vmatpush.msra.mxu0 %v79
    %569 = vmatpush.msra.mxu0 %v75
    %570 = vmatpush.msra.mxu0 %v71
    %571 = vmatpush.msra.mxu0 %v67
    %572 = vmatpush.msra.mxu0 %v63
    %573 = vmatpush.msra.mxu0 %v59
    %574 = vmatpush.msra.mxu0 %v55
    %575 = vmatpush.msra.mxu0 %v51
    %576 = vmatpush.msra.mxu0 %v47
    %577 = vmatpush.msra.mxu0 %v43
    %578 = vmatpush.msra.mxu0 %v39
    %579 = vmatmul.f32.gmra.mxu0 %v557
    %v580 = vpop.f32.mrf.mxu0
    %v581 = vadd.f32 0.0, %v580
    %582 = vdwg.mxu0
    %583 = vmatpush.msra.mxu0 %v100
    %584 = vmatpush.msra.mxu0 %v96
    %585 = vmatpush.msra.mxu0 %v92
    %586 = vmatpush.msra.mxu0 %v88
    %587 = vmatpush.msra.mxu0 %v84
    %588 = vmatpush.msra.mxu0 %v80
    %589 = vmatpush.msra.mxu0 %v76
    %590 = vmatpush.msra.mxu0 %v72
    %591 = vmatpush.msra.mxu0 %v68
    %592 = vmatpush.msra.mxu0 %v64
    %593 = vmatpush.msra.mxu0 %v60
    %594 = vmatpush.msra.mxu0 %v56
    %595 = vmatpush.msra.mxu0 %v52
    %596 = vmatpush.msra.mxu0 %v48
    %597 = vmatpush.msra.mxu0 %v44
    %598 = vmatpush.msra.mxu0 %v40
    %599 = vmatmul.f32.gmra.mxu0 %v557
    %v600 = vpop.f32.mrf.mxu0
    %v601 = vadd.f32 0.0, %v600
    %602 = vdwg.mxu0
    %603 = vmatpush.msra.mxu0 %v101
    %604 = vmatpush.msra.mxu0 %v97
    %605 = vmatpush.msra.mxu0 %v93
    %606 = vmatpush.msra.mxu0 %v89
    %607 = vmatpush.msra.mxu0 %v85
    %608 = vmatpush.msra.mxu0 %v81
    %609 = vmatpush.msra.mxu0 %v77
    %610 = vmatpush.msra.mxu0 %v73
    %611 = vmatpush.msra.mxu0 %v69
    %612 = vmatpush.msra.mxu0 %v65
    %613 = vmatpush.msra.mxu0 %v61
    %614 = vmatpush.msra.mxu0 %v57
    %615 = vmatpush.msra.mxu0 %v53
    %616 = vmatpush.msra.mxu0 %v49
    %617 = vmatpush.msra.mxu0 %v45
    %618 = vmatpush.msra.mxu0 %v41
    %619 = vmatmul.f32.gmra.mxu0 %v557
    %v620 = vpop.f32.mrf.mxu0
    %v621 = vadd.f32 0.0, %v620
    %622 = vdwg.mxu0
    %623 = vmatpush.msra.mxu0 %v102
    %624 = vmatpush.msra.mxu0 %v98
    %625 = vmatpush.msra.mxu0 %v94
    %626 = vmatpush.msra.mxu0 %v90
    %627 = vmatpush.msra.mxu0 %v86
    %628 = vmatpush.msra.mxu0 %v82
    %629 = vmatpush.msra.mxu0 %v78
    %630 = vmatpush.msra.mxu0 %v74
    %631 = vmatpush.msra.mxu0 %v70
    %632 = vmatpush.msra.mxu0 %v66
    %633 = vmatpush.msra.mxu0 %v62
    %634 = vmatpush.msra.mxu0 %v58
    %635 = vmatpush.msra.mxu0 %v54
    %636 = vmatpush.msra.mxu0 %v50
    %637 = vmatpush.msra.mxu0 %v46
    %638 = vmatpush.msra.mxu0 %v42
    %639 = vmatmul.f32.gmra.mxu0 %v557
    %v640 = vpop.f32.mrf.mxu0
    %v641 = vadd.f32 0.0, %v640
    %642 = vdwg.mxu0
    %v643 = vadd.f32 %v559, %v581
    %v644 = vadd.f32 %v560, %v601
    %v645 = vadd.f32 %v561, %v621
    %v646 = vadd.f32 %v562, %v641
    %v647 = vxor.u32 %v643, 2147483648
    %v648 = vmul.f32 %v647, 1.442695
    %v649 = vpow.pop %v648
    %v650 = vadd.f32 %v649, 1.0
    %v651 = vrcp.pop %v650
    %v652 = vmul.f32 %v650, %v651
    %v653 = vsub.f32 1.0, %v652
    %v654 = vmul.f32 %v651, %v653
    %v655 = vadd.f32 %v651, %v654
    %vm656 = vweird.f32 %v650
    %vm657 = vweird.f32 %v651
    %vm658 = vmor %vm656, %vm657
    %v659 = vsel %vm658, %v651, %v655
    %v660 = vand.u32 2147483647, %v650
    %vm661 = vcmp.eq.f32.partialorder %v660, 8.507059e+37
    %v662 = vand.u32 %v650, 2147483648
    %v663 = vor.u32 1.1754944e-38, %v662
    %v664 = vsel %vm661, %v663, %v659
    %v665 = vmul.f32 1.0, %v664
    %v666 = vxor.u32 %v644, 2147483648
    %v667 = vmul.f32 %v666, 1.442695
    %v668 = vpow.pop %v667
    %v669 = vadd.f32 %v668, 1.0
    %v670 = vrcp.pop %v669
    %v671 = vmul.f32 %v669, %v670
    %v672 = vsub.f32 1.0, %v671
    %v673 = vmul.f32 %v670, %v672
    %v674 = vadd.f32 %v670, %v673
    %vm675 = vweird.f32 %v669
    %vm676 = vweird.f32 %v670
    %vm677 = vmor %vm675, %vm676
    %v678 = vsel %vm677, %v670, %v674
    %v679 = vand.u32 2147483647, %v669
    %vm680 = vcmp.eq.f32.partialorder %v679, 8.507059e+37
    %v681 = vand.u32 %v669, 2147483648
    %v682 = vor.u32 1.1754944e-38, %v681
    %v683 = vsel %vm680, %v682, %v678
    %v684 = vmul.f32 1.0, %v683
    %v685 = vtanh.pop %v645
    %v686 = vxor.u32 %v646, 2147483648
    %v687 = vmul.f32 %v686, 1.442695
    %v688 = vpow.pop %v687
    %v689 = vadd.f32 %v688, 1.0
    %v690 = vrcp.pop %v689
    %v691 = vmul.f32 %v689, %v690
    %v692 = vsub.f32 1.0, %v691
    %v693 = vmul.f32 %v690, %v692
    %v694 = vadd.f32 %v690, %v693
    %vm695 = vweird.f32 %v689
    %vm696 = vweird.f32 %v690
    %vm697 = vmor %vm695, %vm696
    %v698 = vsel %vm697, %v690, %v694
    %v699 = vand.u32 2147483647, %v689
    %vm700 = vcmp.eq.f32.partialorder %v699, 8.507059e+37
    %v701 = vand.u32 %v689, 2147483648
    %v702 = vor.u32 1.1754944e-38, %v701
    %v703 = vsel %vm700, %v702, %v698
    %v704 = vmul.f32 1.0, %v703
    %v705 = vmul.f32 %v684, %v555
    %v706 = vmul.f32 %v665, %v685
    %v707 = vadd.f32 %v705, %v706
    %v708 = vtanh.pop %v707
    %v709 = vmul.f32 %v704, %v708
    %s710 = scalar_lea.vmem %s0, 128
    %v711 = vld [vmem:[%s710] sm:$0xff]
    %v712 = vld [vmem:[%s710 + $0x8] sm:$0xff]
    %v713 = vld [vmem:[%s710 + $0x10] sm:$0xff]
    %v714 = vld [vmem:[%s710 + $0x18] sm:$0xff]
    %715 = vmatpush.msra.mxu0 %v99
    %716 = vmatpush.msra.mxu0 %v95
    %717 = vmatpush.msra.mxu0 %v91
    %718 = vmatpush.msra.mxu0 %v87
    %719 = vmatpush.msra.mxu0 %v83
    %720 = vmatpush.msra.mxu0 %v79
    %721 = vmatpush.msra.mxu0 %v75
    %722 = vmatpush.msra.mxu0 %v71
    %723 = vmatpush.msra.mxu0 %v67
    %724 = vmatpush.msra.mxu0 %v63
    %725 = vmatpush.msra.mxu0 %v59
    %726 = vmatpush.msra.mxu0 %v55
    %727 = vmatpush.msra.mxu0 %v51
    %728 = vmatpush.msra.mxu0 %v47
    %729 = vmatpush.msra.mxu0 %v43
    %730 = vmatpush.msra.mxu0 %v39
    %731 = vmatmul.f32.gmra.mxu0 %v709
    %v732 = vpop.f32.mrf.mxu0
    %v733 = vadd.f32 0.0, %v732
    %734 = vdwg.mxu0
    %735 = vmatpush.msra.mxu0 %v100
    %736 = vmatpush.msra.mxu0 %v96
    %737 = vmatpush.msra.mxu0 %v92
    %738 = vmatpush.msra.mxu0 %v88
    %739 = vmatpush.msra.mxu0 %v84
    %740 = vmatpush.msra.mxu0 %v80
    %741 = vmatpush.msra.mxu0 %v76
    %742 = vmatpush.msra.mxu0 %v72
    %743 = vmatpush.msra.mxu0 %v68
    %744 = vmatpush.msra.mxu0 %v64
    %745 = vmatpush.msra.mxu0 %v60
    %746 = vmatpush.msra.mxu0 %v56
    %747 = vmatpush.msra.mxu0 %v52
    %748 = vmatpush.msra.mxu0 %v48
    %749 = vmatpush.msra.mxu0 %v44
    %750 = vmatpush.msra.mxu0 %v40
    %751 = vmatmul.f32.gmra.mxu0 %v709
    %v752 = vpop.f32.mrf.mxu0
    %v753 = vadd.f32 0.0, %v752
    %754 = vdwg.mxu0
    %755 = vmatpush.msra.mxu0 %v101
    %756 = vmatpush.msra.mxu0 %v97
    %757 = vmatpush.msra.mxu0 %v93
    %758 = vmatpush.msra.mxu0 %v89
    %759 = vmatpush.msra.mxu0 %v85
    %760 = vmatpush.msra.mxu0 %v81
    %761 = vmatpush.msra.mxu0 %v77
    %762 = vmatpush.msra.mxu0 %v73
    %763 = vmatpush.msra.mxu0 %v69
    %764 = vmatpush.msra.mxu0 %v65
    %765 = vmatpush.msra.mxu0 %v61
    %766 = vmatpush.msra.mxu0 %v57
    %767 = vmatpush.msra.mxu0 %v53
    %768 = vmatpush.msra.mxu0 %v49
    %769 = vmatpush.msra.mxu0 %v45
    %770 = vmatpush.msra.mxu0 %v41
    %771 = vmatmul.f32.gmra.mxu0 %v709
    %v772 = vpop.f32.mrf.mxu0
    %v773 = vadd.f32 0.0, %v772
    %774 = vdwg.mxu0
    %775 = vmatpush.msra.mxu0 %v102
    %776 = vmatpush.msra.mxu0 %v98
    %777 = vmatpush.msra.mxu0 %v94
    %778 = vmatpush.msra.mxu0 %v90
    %779 = vmatpush.msra.mxu0 %v86
    %780 = vmatpush.msra.mxu0 %v82
    %781 = vmatpush.msra.mxu0 %v78
    %782 = vmatpush.msra.mxu0 %v74
    %783 = vmatpush.msra.mxu0 %v70
    %784 = vmatpush.msra.mxu0 %v66
    %785 = vmatpush.msra.mxu0 %v62
    %786 = vmatpush.msra.mxu0 %v58
    %787 = vmatpush.msra.mxu0 %v54
    %788 = vmatpush.msra.mxu0 %v50
    %789 = vmatpush.msra.mxu0 %v46
    %790 = vmatpush.msra.mxu0 %v42
    %791 = vmatmul.f32.gmra.mxu0 %v709
    %v792 = vpop.f32.mrf.mxu0
    %v793 = vadd.f32 0.0, %v792
    %794 = vdwg.mxu0
    %v795 = vadd.f32 %v711, %v733
    %v796 = vadd.f32 %v712, %v753
    %v797 = vadd.f32 %v713, %v773
    %v798 = vadd.f32 %v714, %v793
    %v799 = vxor.u32 %v795, 2147483648
    %v800 = vmul.f32 %v799, 1.442695
    %v801 = vpow.pop %v800
    %v802 = vadd.f32 %v801, 1.0
    %v803 = vrcp.pop %v802
    %v804 = vmul.f32 %v802, %v803
    %v805 = vsub.f32 1.0, %v804
    %v806 = vmul.f32 %v803, %v805
    %v807 = vadd.f32 %v803, %v806
    %vm808 = vweird.f32 %v802
    %vm809 = vweird.f32 %v803
    %vm810 = vmor %vm808, %vm809
    %v811 = vsel %vm810, %v803, %v807
    %v812 = vand.u32 2147483647, %v802
    %vm813 = vcmp.eq.f32.partialorder %v812, 8.507059e+37
    %v814 = vand.u32 %v802, 2147483648
    %v815 = vor.u32 1.1754944e-38, %v814
    %v816 = vsel %vm813, %v815, %v811
    %v817 = vmul.f32 1.0, %v816
    %v818 = vxor.u32 %v796, 2147483648
    %v819 = vmul.f32 %v818, 1.442695
    %v820 = vpow.pop %v819
    %v821 = vadd.f32 %v820, 1.0
    %v822 = vrcp.pop %v821
    %v823 = vmul.f32 %v821, %v822
    %v824 = vsub.f32 1.0, %v823
    %v825 = vmul.f32 %v822, %v824
    %v826 = vadd.f32 %v822, %v825
    %vm827 = vweird.f32 %v821
    %vm828 = vweird.f32 %v822
    %vm829 = vmor %vm827, %vm828
    %v830 = vsel %vm829, %v822, %v826
    %v831 = vand.u32 2147483647, %v821
    %vm832 = vcmp.eq.f32.partialorder %v831, 8.507059e+37
    %v833 = vand.u32 %v821, 2147483648
    %v834 = vor.u32 1.1754944e-38, %v833
    %v835 = vsel %vm832, %v834, %v830
    %v836 = vmul.f32 1.0, %v835
    %v837 = vtanh.pop %v797
    %v838 = vxor.u32 %v798, 2147483648
    %v839 = vmul.f32 %v838, 1.442695
    %v840 = vpow.pop %v839
    %v841 = vadd.f32 %v840, 1.0
    %v842 = vrcp.pop %v841
    %v843 = vmul.f32 %v841, %v842
    %v844 = vsub.f32 1.0, %v843
    %v845 = vmul.f32 %v842, %v844
    %v846 = vadd.f32 %v842, %v845
    %vm847 = vweird.f32 %v841
    %vm848 = vweird.f32 %v842
    %vm849 = vmor %vm847, %vm848
    %v850 = vsel %vm849, %v842, %v846
    %v851 = vand.u32 2147483647, %v841
    %vm852 = vcmp.eq.f32.partialorder %v851, 8.507059e+37
    %v853 = vand.u32 %v841, 2147483648
    %v854 = vor.u32 1.1754944e-38, %v853
    %v855 = vsel %vm852, %v854, %v850
    %v856 = vmul.f32 1.0, %v855
    %v857 = vmul.f32 %v836, %v707
    %v858 = vmul.f32 %v817, %v837
    %v859 = vadd.f32 %v857, %v858
    %v860 = vtanh.pop %v859
    %v861 = vmul.f32 %v856, %v860
    %s862 = scalar_lea.vmem %s1, 32
    %v863 = vld [vmem:[%s862] sm:$0xff]
    %865 = vset.pattern.permute.xlu0 0
    %866 = vperm.xlu0 %865, %v863
    %v867 = vpop.permute.xlu0 %866
    %v869 = vmul.f32 %v867, %v861
    %v870 = vsub.f32 1.0, %v863
    %872 = vset.pattern.permute.xlu0 0
    %873 = vperm.xlu0 %872, %v870
    %v874 = vpop.permute.xlu0 %873
    %v876 = vmul.f32 %v874, %v709
    %v877 = vadd.f32 %v869, %v876
    %v878 = vmul.f32 %v867, %v859
    %v879 = vmul.f32 %v874, %v707
    %v880 = vadd.f32 %v878, %v879
    %s881 = scalar_lea.vmem %s0, 160
    %v882 = vld [vmem:[%s881] sm:$0xff]
    %v883 = vld [vmem:[%s881 + $0x8] sm:$0xff]
    %v884 = vld [vmem:[%s881 + $0x10] sm:$0xff]
    %v885 = vld [vmem:[%s881 + $0x18] sm:$0xff]
    %886 = vmatpush.msra.mxu0 %v99
    %887 = vmatpush.msra.mxu0 %v95
    %888 = vmatpush.msra.mxu0 %v91
    %889 = vmatpush.msra.mxu0 %v87
    %890 = vmatpush.msra.mxu0 %v83
    %891 = vmatpush.msra.mxu0 %v79
    %892 = vmatpush.msra.mxu0 %v75
    %893 = vmatpush.msra.mxu0 %v71
    %894 = vmatpush.msra.mxu0 %v67
    %895 = vmatpush.msra.mxu0 %v63
    %896 = vmatpush.msra.mxu0 %v59
    %897 = vmatpush.msra.mxu0 %v55
    %898 = vmatpush.msra.mxu0 %v51
    %899 = vmatpush.msra.mxu0 %v47
    %900 = vmatpush.msra.mxu0 %v43
    %901 = vmatpush.msra.mxu0 %v39
    %902 = vmatmul.f32.gmra.mxu0 %v877
    %v903 = vpop.f32.mrf.mxu0
    %v904 = vadd.f32 0.0, %v903
    %905 = vdwg.mxu0
    %906 = vmatpush.msra.mxu0 %v100
    %907 = vmatpush.msra.mxu0 %v96
    %908 = vmatpush.msra.mxu0 %v92
    %909 = vmatpush.msra.mxu0 %v88
    %910 = vmatpush.msra.mxu0 %v84
    %911 = vmatpush.msra.mxu0 %v80
    %912 = vmatpush.msra.mxu0 %v76
    %913 = vmatpush.msra.mxu0 %v72
    %914 = vmatpush.msra.mxu0 %v68
    %915 = vmatpush.msra.mxu0 %v64
    %916 = vmatpush.msra.mxu0 %v60
    %917 = vmatpush.msra.mxu0 %v56
    %918 = vmatpush.msra.mxu0 %v52
    %919 = vmatpush.msra.mxu0 %v48
    %920 = vmatpush.msra.mxu0 %v44
    %921 = vmatpush.msra.mxu0 %v40
    %922 = vmatmul.f32.gmra.mxu0 %v877
    %v923 = vpop.f32.mrf.mxu0
    %v924 = vadd.f32 0.0, %v923
    %925 = vdwg.mxu0
    %926 = vmatpush.msra.mxu0 %v101
    %927 = vmatpush.msra.mxu0 %v97
    %928 = vmatpush.msra.mxu0 %v93
    %929 = vmatpush.msra.mxu0 %v89
    %930 = vmatpush.msra.mxu0 %v85
    %931 = vmatpush.msra.mxu0 %v81
    %932 = vmatpush.msra.mxu0 %v77
    %933 = vmatpush.msra.mxu0 %v73
    %934 = vmatpush.msra.mxu0 %v69
    %935 = vmatpush.msra.mxu0 %v65
    %936 = vmatpush.msra.mxu0 %v61
    %937 = vmatpush.msra.mxu0 %v57
    %938 = vmatpush.msra.mxu0 %v53
    %939 = vmatpush.msra.mxu0 %v49
    %940 = vmatpush.msra.mxu0 %v45
    %941 = vmatpush.msra.mxu0 %v41
    %942 = vmatmul.f32.gmra.mxu0 %v877
    %v943 = vpop.f32.mrf.mxu0
    %v944 = vadd.f32 0.0, %v943
    %945 = vdwg.mxu0
    %946 = vmatpush.msra.mxu0 %v102
    %947 = vmatpush.msra.mxu0 %v98
    %948 = vmatpush.msra.mxu0 %v94
    %949 = vmatpush.msra.mxu0 %v90
    %950 = vmatpush.msra.mxu0 %v86
    %951 = vmatpush.msra.mxu0 %v82
    %952 = vmatpush.msra.mxu0 %v78
    %953 = vmatpush.msra.mxu0 %v74
    %954 = vmatpush.msra.mxu0 %v70
    %955 = vmatpush.msra.mxu0 %v66
    %956 = vmatpush.msra.mxu0 %v62
    %957 = vmatpush.msra.mxu0 %v58
    %958 = vmatpush.msra.mxu0 %v54
    %959 = vmatpush.msra.mxu0 %v50
    %960 = vmatpush.msra.mxu0 %v46
    %961 = vmatpush.msra.mxu0 %v42
    %962 = vmatmul.f32.gmra.mxu0 %v877
    %v963 = vpop.f32.mrf.mxu0
    %v964 = vadd.f32 0.0, %v963
    %965 = vdwg.mxu0
    %v966 = vadd.f32 %v882, %v904
    %v967 = vadd.f32 %v883, %v924
    %v968 = vadd.f32 %v884, %v944
    %v969 = vadd.f32 %v885, %v964
    %v970 = vxor.u32 %v966, 2147483648
    %v971 = vmul.f32 %v970, 1.442695
    %v972 = vpow.pop %v971
    %v973 = vadd.f32 %v972, 1.0
    %v974 = vrcp.pop %v973
    %v975 = vmul.f32 %v973, %v974
    %v976 = vsub.f32 1.0, %v975
    %v977 = vmul.f32 %v974, %v976
    %v978 = vadd.f32 %v974, %v977
    %vm979 = vweird.f32 %v973
    %vm980 = vweird.f32 %v974
    %vm981 = vmor %vm979, %vm980
    %v982 = vsel %vm981, %v974, %v978
    %v983 = vand.u32 2147483647, %v973
    %vm984 = vcmp.eq.f32.partialorder %v983, 8.507059e+37
    %v985 = vand.u32 %v973, 2147483648
    %v986 = vor.u32 1.1754944e-38, %v985
    %v987 = vsel %vm984, %v986, %v982
    %v988 = vmul.f32 1.0, %v987
    %v989 = vxor.u32 %v967, 2147483648
    %v990 = vmul.f32 %v989, 1.442695
    %v991 = vpow.pop %v990
    %v992 = vadd.f32 %v991, 1.0
    %v993 = vrcp.pop %v992
    %v994 = vmul.f32 %v992, %v993
    %v995 = vsub.f32 1.0, %v994
    %v996 = vmul.f32 %v993, %v995
    %v997 = vadd.f32 %v993, %v996
    %vm998 = vweird.f32 %v992
    %vm999 = vweird.f32 %v993
    %vm1000 = vmor %vm998, %vm999
    %v1001 = vsel %vm1000, %v993, %v997
    %v1002 = vand.u32 2147483647, %v992
    %vm1003 = vcmp.eq.f32.partialorder %v1002, 8.507059e+37
    %v1004 = vand.u32 %v992, 2147483648
    %v1005 = vor.u32 1.1754944e-38, %v1004
    %v1006 = vsel %vm1003, %v1005, %v1001
    %v1007 = vmul.f32 1.0, %v1006
    %v1008 = vtanh.pop %v968
    %v1009 = vxor.u32 %v969, 2147483648
    %v1010 = vmul.f32 %v1009, 1.442695
    %v1011 = vpow.pop %v1010
    %v1012 = vadd.f32 %v1011, 1.0
    %v1013 = vrcp.pop %v1012
    %v1014 = vmul.f32 %v1012, %v1013
    %v1015 = vsub.f32 1.0, %v1014
    %v1016 = vmul.f32 %v1013, %v1015
    %v1017 = vadd.f32 %v1013, %v1016
    %vm1018 = vweird.f32 %v1012
    %vm1019 = vweird.f32 %v1013
    %vm1020 = vmor %vm1018, %vm1019
    %v1021 = vsel %vm1020, %v1013, %v1017
    %v1022 = vand.u32 2147483647, %v1012
    %vm1023 = vcmp.eq.f32.partialorder %v1022, 8.507059e+37
    %v1024 = vand.u32 %v1012, 2147483648
    %v1025 = vor.u32 1.1754944e-38, %v1024
    %v1026 = vsel %vm1023, %v1025, %v1021
    %v1027 = vmul.f32 1.0, %v1026
    %v1028 = vmul.f32 %v1007, %v880
    %v1029 = vmul.f32 %v988, %v1008
    %v1030 = vadd.f32 %v1028, %v1029
    %v1031 = vtanh.pop %v1030
    %v1032 = vmul.f32 %v1027, %v1031
    %s1033 = scalar_lea.vmem %s1, 40
    %v1034 = vld [vmem:[%s1033] sm:$0xff]
    %1036 = vset.pattern.permute.xlu0 0
    %1037 = vperm.xlu0 %1036, %v1034
    %v1038 = vpop.permute.xlu0 %1037
    %v1040 = vmul.f32 %v1038, %v1032
    %v1041 = vsub.f32 1.0, %v1034
    %1043 = vset.pattern.permute.xlu0 0
    %1044 = vperm.xlu0 %1043, %v1041
    %v1045 = vpop.permute.xlu0 %1044
    %v1047 = vmul.f32 %v1045, %v877
    %v1048 = vadd.f32 %v1040, %v1047
    %v1049 = vmul.f32 %v1038, %v1030
    %v1050 = vmul.f32 %v1045, %v880
    %v1051 = vadd.f32 %v1049, %v1050
    %s1052 = scalar_lea.vmem %s0, 192
    %v1053 = vld [vmem:[%s1052] sm:$0xff]
    %v1054 = vld [vmem:[%s1052 + $0x8] sm:$0xff]
    %v1055 = vld [vmem:[%s1052 + $0x10] sm:$0xff]
    %v1056 = vld [vmem:[%s1052 + $0x18] sm:$0xff]
    %1057 = vmatpush.msra.mxu0 %v99
    %1058 = vmatpush.msra.mxu0 %v95
    %1059 = vmatpush.msra.mxu0 %v91
    %1060 = vmatpush.msra.mxu0 %v87
    %1061 = vmatpush.msra.mxu0 %v83
    %1062 = vmatpush.msra.mxu0 %v79
    %1063 = vmatpush.msra.mxu0 %v75
    %1064 = vmatpush.msra.mxu0 %v71
    %1065 = vmatpush.msra.mxu0 %v67
    %1066 = vmatpush.msra.mxu0 %v63
    %1067 = vmatpush.msra.mxu0 %v59
    %1068 = vmatpush.msra.mxu0 %v55
    %1069 = vmatpush.msra.mxu0 %v51
    %1070 = vmatpush.msra.mxu0 %v47
    %1071 = vmatpush.msra.mxu0 %v43
    %1072 = vmatpush.msra.mxu0 %v39
    %1073 = vmatmul.f32.gmra.mxu0 %v1048
    %v1074 = vpop.f32.mrf.mxu0
    %v1075 = vadd.f32 0.0, %v1074
    %1076 = vdwg.mxu0
    %1077 = vmatpush.msra.mxu0 %v100
    %1078 = vmatpush.msra.mxu0 %v96
    %1079 = vmatpush.msra.mxu0 %v92
    %1080 = vmatpush.msra.mxu0 %v88
    %1081 = vmatpush.msra.mxu0 %v84
    %1082 = vmatpush.msra.mxu0 %v80
    %1083 = vmatpush.msra.mxu0 %v76
    %1084 = vmatpush.msra.mxu0 %v72
    %1085 = vmatpush.msra.mxu0 %v68
    %1086 = vmatpush.msra.mxu0 %v64
    %1087 = vmatpush.msra.mxu0 %v60
    %1088 = vmatpush.msra.mxu0 %v56
    %1089 = vmatpush.msra.mxu0 %v52
    %1090 = vmatpush.msra.mxu0 %v48
    %1091 = vmatpush.msra.mxu0 %v44
    %1092 = vmatpush.msra.mxu0 %v40
    %1093 = vmatmul.f32.gmra.mxu0 %v1048
    %v1094 = vpop.f32.mrf.mxu0
    %v1095 = vadd.f32 0.0, %v1094
    %1096 = vdwg.mxu0
    %1097 = vmatpush.msra.mxu0 %v101
    %1098 = vmatpush.msra.mxu0 %v97
    %1099 = vmatpush.msra.mxu0 %v93
    %1100 = vmatpush.msra.mxu0 %v89
    %1101 = vmatpush.msra.mxu0 %v85
    %1102 = vmatpush.msra.mxu0 %v81
    %1103 = vmatpush.msra.mxu0 %v77
    %1104 = vmatpush.msra.mxu0 %v73
    %1105 = vmatpush.msra.mxu0 %v69
    %1106 = vmatpush.msra.mxu0 %v65
    %1107 = vmatpush.msra.mxu0 %v61
    %1108 = vmatpush.msra.mxu0 %v57
    %1109 = vmatpush.msra.mxu0 %v53
    %1110 = vmatpush.msra.mxu0 %v49
    %1111 = vmatpush.msra.mxu0 %v45
    %1112 = vmatpush.msra.mxu0 %v41
    %1113 = vmatmul.f32.gmra.mxu0 %v1048
    %v1114 = vpop.f32.mrf.mxu0
    %v1115 = vadd.f32 0.0, %v1114
    %1116 = vdwg.mxu0
    %1117 = vmatpush.msra.mxu0 %v102
    %1118 = vmatpush.msra.mxu0 %v98
    %1119 = vmatpush.msra.mxu0 %v94
    %1120 = vmatpush.msra.mxu0 %v90
    %1121 = vmatpush.msra.mxu0 %v86
    %1122 = vmatpush.msra.mxu0 %v82
    %1123 = vmatpush.msra.mxu0 %v78
    %1124 = vmatpush.msra.mxu0 %v74
    %1125 = vmatpush.msra.mxu0 %v70
    %1126 = vmatpush.msra.mxu0 %v66
    %1127 = vmatpush.msra.mxu0 %v62
    %1128 = vmatpush.msra.mxu0 %v58
    %1129 = vmatpush.msra.mxu0 %v54
    %1130 = vmatpush.msra.mxu0 %v50
    %1131 = vmatpush.msra.mxu0 %v46
    %1132 = vmatpush.msra.mxu0 %v42
    %1133 = vmatmul.f32.gmra.mxu0 %v1048
    %v1134 = vpop.f32.mrf.mxu0
    %v1135 = vadd.f32 0.0, %v1134
    %1136 = vdwg.mxu0
    %v1137 = vadd.f32 %v1053, %v1075
    %v1138 = vadd.f32 %v1054, %v1095
    %v1139 = vadd.f32 %v1055, %v1115
    %v1140 = vadd.f32 %v1056, %v1135
    %v1141 = vxor.u32 %v1137, 2147483648
    %v1142 = vmul.f32 %v1141, 1.442695
    %v1143 = vpow.pop %v1142
    %v1144 = vadd.f32 %v1143, 1.0
    %v1145 = vrcp.pop %v1144
    %v1146 = vmul.f32 %v1144, %v1145
    %v1147 = vsub.f32 1.0, %v1146
    %v1148 = vmul.f32 %v1145, %v1147
    %v1149 = vadd.f32 %v1145, %v1148
    %vm1150 = vweird.f32 %v1144
    %vm1151 = vweird.f32 %v1145
    %vm1152 = vmor %vm1150, %vm1151
    %v1153 = vsel %vm1152, %v1145, %v1149
    %v1154 = vand.u32 2147483647, %v1144
    %vm1155 = vcmp.eq.f32.partialorder %v1154, 8.507059e+37
    %v1156 = vand.u32 %v1144, 2147483648
    %v1157 = vor.u32 1.1754944e-38, %v1156
    %v1158 = vsel %vm1155, %v1157, %v1153
    %v1159 = vmul.f32 1.0, %v1158
    %v1160 = vxor.u32 %v1138, 2147483648
    %v1161 = vmul.f32 %v1160, 1.442695
    %v1162 = vpow.pop %v1161
    %v1163 = vadd.f32 %v1162, 1.0
    %v1164 = vrcp.pop %v1163
    %v1165 = vmul.f32 %v1163, %v1164
    %v1166 = vsub.f32 1.0, %v1165
    %v1167 = vmul.f32 %v1164, %v1166
    %v1168 = vadd.f32 %v1164, %v1167
    %vm1169 = vweird.f32 %v1163
    %vm1170 = vweird.f32 %v1164
    %vm1171 = vmor %vm1169, %vm1170
    %v1172 = vsel %vm1171, %v1164, %v1168
    %v1173 = vand.u32 2147483647, %v1163
    %vm1174 = vcmp.eq.f32.partialorder %v1173, 8.507059e+37
    %v1175 = vand.u32 %v1163, 2147483648
    %v1176 = vor.u32 1.1754944e-38, %v1175
    %v1177 = vsel %vm1174, %v1176, %v1172
    %v1178 = vmul.f32 1.0, %v1177
    %v1179 = vtanh.pop %v1139
    %v1180 = vxor.u32 %v1140, 2147483648
    %v1181 = vmul.f32 %v1180, 1.442695
    %v1182 = vpow.pop %v1181
    %v1183 = vadd.f32 %v1182, 1.0
    %v1184 = vrcp.pop %v1183
    %v1185 = vmul.f32 %v1183, %v1184
    %v1186 = vsub.f32 1.0, %v1185
    %v1187 = vmul.f32 %v1184, %v1186
    %v1188 = vadd.f32 %v1184, %v1187
    %vm1189 = vweird.f32 %v1183
    %vm1190 = vweird.f32 %v1184
    %vm1191 = vmor %vm1189, %vm1190
    %v1192 = vsel %vm1191, %v1184, %v1188
    %v1193 = vand.u32 2147483647, %v1183
    %vm1194 = vcmp.eq.f32.partialorder %v1193, 8.507059e+37
    %v1195 = vand.u32 %v1183, 2147483648
    %v1196 = vor.u32 1.1754944e-38, %v1195
    %v1197 = vsel %vm1194, %v1196, %v1192
    %v1198 = vmul.f32 1.0, %v1197
    %v1199 = vmul.f32 %v1178, %v1051
    %v1200 = vmul.f32 %v1159, %v1179
    %v1201 = vadd.f32 %v1199, %v1200
    %v1202 = vtanh.pop %v1201
    %v1203 = vmul.f32 %v1198, %v1202
    %s1204 = scalar_lea.vmem %s1, 48
    %v1205 = vld [vmem:[%s1204] sm:$0xff]
    %1207 = vset.pattern.permute.xlu0 0
    %1208 = vperm.xlu0 %1207, %v1205
    %v1209 = vpop.permute.xlu0 %1208
    %v1211 = vmul.f32 %v1209, %v1203
    %v1212 = vsub.f32 1.0, %v1205
    %1214 = vset.pattern.permute.xlu0 0
    %1215 = vperm.xlu0 %1214, %v1212
    %v1216 = vpop.permute.xlu0 %1215
    %v1218 = vmul.f32 %v1216, %v1048
    %v1219 = vadd.f32 %v1211, %v1218
    %v1220 = vmul.f32 %v1209, %v1201
    %v1221 = vmul.f32 %v1216, %v1051
    %v1222 = vadd.f32 %v1220, %v1221
    %s1223 = scalar_lea.vmem %s0, 224
    %v1224 = vld [vmem:[%s1223] sm:$0xff]
    %v1225 = vld [vmem:[%s1223 + $0x8] sm:$0xff]
    %v1226 = vld [vmem:[%s1223 + $0x10] sm:$0xff]
    %v1227 = vld [vmem:[%s1223 + $0x18] sm:$0xff]
    %1228 = vmatpush.msra.mxu0 %v99
    %1229 = vmatpush.msra.mxu0 %v95
    %1230 = vmatpush.msra.mxu0 %v91
    %1231 = vmatpush.msra.mxu0 %v87
    %1232 = vmatpush.msra.mxu0 %v83
    %1233 = vmatpush.msra.mxu0 %v79
    %1234 = vmatpush.msra.mxu0 %v75
    %1235 = vmatpush.msra.mxu0 %v71
    %1236 = vmatpush.msra.mxu0 %v67
    %1237 = vmatpush.msra.mxu0 %v63
    %1238 = vmatpush.msra.mxu0 %v59
    %1239 = vmatpush.msra.mxu0 %v55
    %1240 = vmatpush.msra.mxu0 %v51
    %1241 = vmatpush.msra.mxu0 %v47
    %1242 = vmatpush.msra.mxu0 %v43
    %1243 = vmatpush.msra.mxu0 %v39
    %1244 = vmatmul.f32.gmra.mxu0 %v1219
    %v1245 = vpop.f32.mrf.mxu0
    %v1246 = vadd.f32 0.0, %v1245
    %1247 = vdwg.mxu0
    %1248 = vmatpush.msra.mxu0 %v100
    %1249 = vmatpush.msra.mxu0 %v96
    %1250 = vmatpush.msra.mxu0 %v92
    %1251 = vmatpush.msra.mxu0 %v88
    %1252 = vmatpush.msra.mxu0 %v84
    %1253 = vmatpush.msra.mxu0 %v80
    %1254 = vmatpush.msra.mxu0 %v76
    %1255 = vmatpush.msra.mxu0 %v72
    %1256 = vmatpush.msra.mxu0 %v68
    %1257 = vmatpush.msra.mxu0 %v64
    %1258 = vmatpush.msra.mxu0 %v60
    %1259 = vmatpush.msra.mxu0 %v56
    %1260 = vmatpush.msra.mxu0 %v52
    %1261 = vmatpush.msra.mxu0 %v48
    %1262 = vmatpush.msra.mxu0 %v44
    %1263 = vmatpush.msra.mxu0 %v40
    %1264 = vmatmul.f32.gmra.mxu0 %v1219
    %v1265 = vpop.f32.mrf.mxu0
    %v1266 = vadd.f32 0.0, %v1265
    %1267 = vdwg.mxu0
    %1268 = vmatpush.msra.mxu0 %v101
    %1269 = vmatpush.msra.mxu0 %v97
    %1270 = vmatpush.msra.mxu0 %v93
    %1271 = vmatpush.msra.mxu0 %v89
    %1272 = vmatpush.msra.mxu0 %v85
    %1273 = vmatpush.msra.mxu0 %v81
    %1274 = vmatpush.msra.mxu0 %v77
    %1275 = vmatpush.msra.mxu0 %v73
    %1276 = vmatpush.msra.mxu0 %v69
    %1277 = vmatpush.msra.mxu0 %v65
    %1278 = vmatpush.msra.mxu0 %v61
    %1279 = vmatpush.msra.mxu0 %v57
    %1280 = vmatpush.msra.mxu0 %v53
    %1281 = vmatpush.msra.mxu0 %v49
    %1282 = vmatpush.msra.mxu0 %v45
    %1283 = vmatpush.msra.mxu0 %v41
    %1284 = vmatmul.f32.gmra.mxu0 %v1219
    %v1285 = vpop.f32.mrf.mxu0
    %v1286 = vadd.f32 0.0, %v1285
    %1287 = vdwg.mxu0
    %1288 = vmatpush.msra.mxu0 %v102
    %1289 = vmatpush.msra.mxu0 %v98
    %1290 = vmatpush.msra.mxu0 %v94
    %1291 = vmatpush.msra.mxu0 %v90
    %1292 = vmatpush.msra.mxu0 %v86
    %1293 = vmatpush.msra.mxu0 %v82
    %1294 = vmatpush.msra.mxu0 %v78
    %1295 = vmatpush.msra.mxu0 %v74
    %1296 = vmatpush.msra.mxu0 %v70
    %1297 = vmatpush.msra.mxu0 %v66
    %1298 = vmatpush.msra.mxu0 %v62
    %1299 = vmatpush.msra.mxu0 %v58
    %1300 = vmatpush.msra.mxu0 %v54
    %1301 = vmatpush.msra.mxu0 %v50
    %1302 = vmatpush.msra.mxu0 %v46
    %1303 = vmatpush.msra.mxu0 %v42
    %1304 = vmatmul.f32.gmra.mxu0 %v1219
    %v1305 = vpop.f32.mrf.mxu0
    %v1306 = vadd.f32 0.0, %v1305
    %1307 = vdwg.mxu0
    %v1308 = vadd.f32 %v1224, %v1246
    %v1309 = vadd.f32 %v1225, %v1266
    %v1310 = vadd.f32 %v1226, %v1286
    %v1311 = vadd.f32 %v1227, %v1306
    %v1312 = vxor.u32 %v1308, 2147483648
    %v1313 = vmul.f32 %v1312, 1.442695
    %v1314 = vpow.pop %v1313
    %v1315 = vadd.f32 %v1314, 1.0
    %v1316 = vrcp.pop %v1315
    %v1317 = vmul.f32 %v1315, %v1316
    %v1318 = vsub.f32 1.0, %v1317
    %v1319 = vmul.f32 %v1316, %v1318
    %v1320 = vadd.f32 %v1316, %v1319
    %vm1321 = vweird.f32 %v1315
    %vm1322 = vweird.f32 %v1316
    %vm1323 = vmor %vm1321, %vm1322
    %v1324 = vsel %vm1323, %v1316, %v1320
    %v1325 = vand.u32 2147483647, %v1315
    %vm1326 = vcmp.eq.f32.partialorder %v1325, 8.507059e+37
    %v1327 = vand.u32 %v1315, 2147483648
    %v1328 = vor.u32 1.1754944e-38, %v1327
    %v1329 = vsel %vm1326, %v1328, %v1324
    %v1330 = vmul.f32 1.0, %v1329
    %v1331 = vxor.u32 %v1309, 2147483648
    %v1332 = vmul.f32 %v1331, 1.442695
    %v1333 = vpow.pop %v1332
    %v1334 = vadd.f32 %v1333, 1.0
    %v1335 = vrcp.pop %v1334
    %v1336 = vmul.f32 %v1334, %v1335
    %v1337 = vsub.f32 1.0, %v1336
    %v1338 = vmul.f32 %v1335, %v1337
    %v1339 = vadd.f32 %v1335, %v1338
    %vm1340 = vweird.f32 %v1334
    %vm1341 = vweird.f32 %v1335
    %vm1342 = vmor %vm1340, %vm1341
    %v1343 = vsel %vm1342, %v1335, %v1339
    %v1344 = vand.u32 2147483647, %v1334
    %vm1345 = vcmp.eq.f32.partialorder %v1344, 8.507059e+37
    %v1346 = vand.u32 %v1334, 2147483648
    %v1347 = vor.u32 1.1754944e-38, %v1346
    %v1348 = vsel %vm1345, %v1347, %v1343
    %v1349 = vmul.f32 1.0, %v1348
    %v1350 = vtanh.pop %v1310
    %v1351 = vxor.u32 %v1311, 2147483648
    %v1352 = vmul.f32 %v1351, 1.442695
    %v1353 = vpow.pop %v1352
    %v1354 = vadd.f32 %v1353, 1.0
    %v1355 = vrcp.pop %v1354
    %v1356 = vmul.f32 %v1354, %v1355
    %v1357 = vsub.f32 1.0, %v1356
    %v1358 = vmul.f32 %v1355, %v1357
    %v1359 = vadd.f32 %v1355, %v1358
    %vm1360 = vweird.f32 %v1354
    %vm1361 = vweird.f32 %v1355
    %vm1362 = vmor %vm1360, %vm1361
    %v1363 = vsel %vm1362, %v1355, %v1359
    %v1364 = vand.u32 2147483647, %v1354
    %vm1365 = vcmp.eq.f32.partialorder %v1364, 8.507059e+37
    %v1366 = vand.u32 %v1354, 2147483648
    %v1367 = vor.u32 1.1754944e-38, %v1366
    %v1368 = vsel %vm1365, %v1367, %v1363
    %v1369 = vmul.f32 1.0, %v1368
    %v1370 = vmul.f32 %v1349, %v1222
    %v1371 = vmul.f32 %v1330, %v1350
    %v1372 = vadd.f32 %v1370, %v1371
    %v1373 = vtanh.pop %v1372
    %v1374 = vmul.f32 %v1369, %v1373
    %s1375 = scalar_lea.vmem %s1, 56
    %v1376 = vld [vmem:[%s1375] sm:$0xff]
    %1378 = vset.pattern.permute.xlu0 0
    %1379 = vperm.xlu0 %1378, %v1376
    %v1380 = vpop.permute.xlu0 %1379
    %v1382 = vmul.f32 %v1380, %v1374
    %v1383 = vsub.f32 1.0, %v1376
    %1385 = vset.pattern.permute.xlu0 0
    %1386 = vperm.xlu0 %1385, %v1383
    %v1387 = vpop.permute.xlu0 %1386
    %v1389 = vmul.f32 %v1387, %v1219
    %v1390 = vadd.f32 %v1382, %v1389
    %v1391 = vld [vmem:[%s3] sm:$0xff]
    %v1392 = vld [vmem:[%s3 + $0x8] sm:$0xff]
    %v1393 = vld [vmem:[%s3 + $0x10] sm:$0xff]
    %v1394 = vld [vmem:[%s3 + $0x18] sm:$0xff]
    %v1395 = vld [vmem:[%s3 + $0x20] sm:$0xff]
    %v1396 = vld [vmem:[%s3 + $0x28] sm:$0xff]
    %v1397 = vld [vmem:[%s3 + $0x30] sm:$0xff]
    %v1398 = vld [vmem:[%s3 + $0x38] sm:$0xff]
    %v1399 = vld [vmem:[%s3 + $0x40] sm:$0xff]
    %v1400 = vld [vmem:[%s3 + $0x48] sm:$0xff]
    %v1401 = vld [vmem:[%s3 + $0x50] sm:$0xff]
    %v1402 = vld [vmem:[%s3 + $0x58] sm:$0xff]
    %v1403 = vld [vmem:[%s3 + $0x60] sm:$0xff]
    %v1404 = vld [vmem:[%s3 + $0x68] sm:$0xff]
    %v1405 = vld [vmem:[%s3 + $0x70] sm:$0xff]
    %v1406 = vld [vmem:[%s3 + $0x78] sm:$0xff]
    %v1407 = vld [vmem:[%s3 + $0x80] sm:$0xff]
    %v1408 = vld [vmem:[%s3 + $0x88] sm:$0xff]
    %v1409 = vld [vmem:[%s3 + $0x90] sm:$0xff]
    %v1410 = vld [vmem:[%s3 + $0x98] sm:$0xff]
    %v1411 = vld [vmem:[%s3 + $0xa0] sm:$0xff]
    %v1412 = vld [vmem:[%s3 + $0xa8] sm:$0xff]
    %v1413 = vld [vmem:[%s3 + $0xb0] sm:$0xff]
    %v1414 = vld [vmem:[%s3 + $0xb8] sm:$0xff]
    %v1415 = vld [vmem:[%s3 + $0xc0] sm:$0xff]
    %v1416 = vld [vmem:[%s3 + $0xc8] sm:$0xff]
    %v1417 = vld [vmem:[%s3 + $0xd0] sm:$0xff]
    %v1418 = vld [vmem:[%s3 + $0xd8] sm:$0xff]
    %v1419 = vld [vmem:[%s3 + $0xe0] sm:$0xff]
    %v1420 = vld [vmem:[%s3 + $0xe8] sm:$0xff]
    %v1421 = vld [vmem:[%s3 + $0xf0] sm:$0xff]
    %v1422 = vld [vmem:[%s3 + $0xf8] sm:$0xff]
    %v1423 = vld [vmem:[%s3 + $0x100] sm:$0xff]
    %v1424 = vld [vmem:[%s3 + $0x108] sm:$0xff]
    %v1425 = vld [vmem:[%s3 + $0x110] sm:$0xff]
    %v1426 = vld [vmem:[%s3 + $0x118] sm:$0xff]
    %v1427 = vld [vmem:[%s3 + $0x120] sm:$0xff]
    %v1428 = vld [vmem:[%s3 + $0x128] sm:$0xff]
    %v1429 = vld [vmem:[%s3 + $0x130] sm:$0xff]
    %v1430 = vld [vmem:[%s3 + $0x138] sm:$0xff]
    %v1431 = vld [vmem:[%s3 + $0x140] sm:$0xff]
    %v1432 = vld [vmem:[%s3 + $0x148] sm:$0xff]
    %v1433 = vld [vmem:[%s3 + $0x150] sm:$0xff]
    %v1434 = vld [vmem:[%s3 + $0x158] sm:$0xff]
    %v1435 = vld [vmem:[%s3 + $0x160] sm:$0xff]
    %v1436 = vld [vmem:[%s3 + $0x168] sm:$0xff]
    %v1437 = vld [vmem:[%s3 + $0x170] sm:$0xff]
    %v1438 = vld [vmem:[%s3 + $0x178] sm:$0xff]
    %v1439 = vld [vmem:[%s3 + $0x180] sm:$0xff]
    %v1440 = vld [vmem:[%s3 + $0x188] sm:$0xff]
    %v1441 = vld [vmem:[%s3 + $0x190] sm:$0xff]
    %v1442 = vld [vmem:[%s3 + $0x198] sm:$0xff]
    %v1443 = vld [vmem:[%s3 + $0x1a0] sm:$0xff]
    %v1444 = vld [vmem:[%s3 + $0x1a8] sm:$0xff]
    %v1445 = vld [vmem:[%s3 + $0x1b0] sm:$0xff]
    %v1446 = vld [vmem:[%s3 + $0x1b8] sm:$0xff]
    %v1447 = vld [vmem:[%s3 + $0x1c0] sm:$0xff]
    %v1448 = vld [vmem:[%s3 + $0x1c8] sm:$0xff]
    %v1449 = vld [vmem:[%s3 + $0x1d0] sm:$0xff]
    %v1450 = vld [vmem:[%s3 + $0x1d8] sm:$0xff]
    %v1451 = vld [vmem:[%s3 + $0x1e0] sm:$0xff]
    %v1452 = vld [vmem:[%s3 + $0x1e8] sm:$0xff]
    %v1453 = vld [vmem:[%s3 + $0x1f0] sm:$0xff]
    %v1454 = vld [vmem:[%s3 + $0x1f8] sm:$0xff]
    %v1456 = vrot.slane %v1390, 2
    %1458 = vmatpush.msra.mxu0 %v1453
    %1459 = vmatpush.msra.mxu0 %v1451
    %1460 = vmatpush.msra.mxu0 %v1449
    %1461 = vmatpush.msra.mxu0 %v1447
    %1462 = vmatpush.msra.mxu0 %v1445
    %1463 = vmatpush.msra.mxu0 %v1443
    %1464 = vmatpush.msra.mxu0 %v1441
    %1465 = vmatpush.msra.mxu0 %v1439
    %1466 = vmatpush.msra.mxu0 %v1437
    %1467 = vmatpush.msra.mxu0 %v1435
    %1468 = vmatpush.msra.mxu0 %v1433
    %1469 = vmatpush.msra.mxu0 %v1431
    %1470 = vmatpush.msra.mxu0 %v1429
    %1471 = vmatpush.msra.mxu0 %v1427
    %1472 = vmatpush.msra.mxu0 %v1425
    %1473 = vmatpush.msra.mxu0 %v1423
    %1474 = vmatmul.f32.gmra.mxu0 %v1456
    %v1475 = vpop.f32.mrf.mxu0
    %v1476 = vadd.f32 0.0, %v1475
    %1477 = vdwg.mxu0
    %1478 = vmatpush.msra.mxu0 %v1454
    %1479 = vmatpush.msra.mxu0 %v1452
    %1480 = vmatpush.msra.mxu0 %v1450
    %1481 = vmatpush.msra.mxu0 %v1448
    %1482 = vmatpush.msra.mxu0 %v1446
    %1483 = vmatpush.msra.mxu0 %v1444
    %1484 = vmatpush.msra.mxu0 %v1442
    %1485 = vmatpush.msra.mxu0 %v1440
    %1486 = vmatpush.msra.mxu0 %v1438
    %1487 = vmatpush.msra.mxu0 %v1436
    %1488 = vmatpush.msra.mxu0 %v1434
    %1489 = vmatpush.msra.mxu0 %v1432
    %1490 = vmatpush.msra.mxu0 %v1430
    %1491 = vmatpush.msra.mxu0 %v1428
    %1492 = vmatpush.msra.mxu0 %v1426
    %1493 = vmatpush.msra.mxu0 %v1424
    %1494 = vmatmul.f32.gmra.mxu0 %v1456
    %v1495 = vpop.f32.mrf.mxu0
    %v1496 = vadd.f32 0.0, %v1495
    %1497 = vdwg.mxu0
    %1498 = vmatpush.msra.mxu0 %v1421
    %1499 = vmatpush.msra.mxu0 %v1419
    %1500 = vmatpush.msra.mxu0 %v1417
    %1501 = vmatpush.msra.mxu0 %v1415
    %1502 = vmatpush.msra.mxu0 %v1413
    %1503 = vmatpush.msra.mxu0 %v1411
    %1504 = vmatpush.msra.mxu0 %v1409
    %1505 = vmatpush.msra.mxu0 %v1407
    %1506 = vmatpush.msra.mxu0 %v1405
    %1507 = vmatpush.msra.mxu0 %v1403
    %1508 = vmatpush.msra.mxu0 %v1401
    %1509 = vmatpush.msra.mxu0 %v1399
    %1510 = vmatpush.msra.mxu0 %v1397
    %1511 = vmatpush.msra.mxu0 %v1395
    %1512 = vmatpush.msra.mxu0 %v1393
    %1513 = vmatpush.msra.mxu0 %v1391
    %1514 = vmatmul.f32.gmra.mxu0 %v1390
    %v1515 = vpop.f32.mrf.mxu0
    %v1516 = vadd.f32 %v1476, %v1515
    %1517 = vdwg.mxu0
    %1518 = vmatpush.msra.mxu0 %v1422
    %1519 = vmatpush.msra.mxu0 %v1420
    %1520 = vmatpush.msra.mxu0 %v1418
    %1521 = vmatpush.msra.mxu0 %v1416
    %1522 = vmatpush.msra.mxu0 %v1414
    %1523 = vmatpush.msra.mxu0 %v1412
    %1524 = vmatpush.msra.mxu0 %v1410
    %1525 = vmatpush.msra.mxu0 %v1408
    %1526 = vmatpush.msra.mxu0 %v1406
    %1527 = vmatpush.msra.mxu0 %v1404
    %1528 = vmatpush.msra.mxu0 %v1402
    %1529 = vmatpush.msra.mxu0 %v1400
    %1530 = vmatpush.msra.mxu0 %v1398
    %1531 = vmatpush.msra.mxu0 %v1396
    %1532 = vmatpush.msra.mxu0 %v1394
    %1533 = vmatpush.msra.mxu0 %v1392
    %1534 = vmatmul.f32.gmra.mxu0 %v1390
    %v1535 = vpop.f32.mrf.mxu0
    %v1536 = vadd.f32 %v1496, %v1535
    %1537 = vdwg.mxu0
    %v1538 = vld [vmem:[%s3 + $0x200] sm:$0xff]
    %v1539 = vld [vmem:[%s3 + $0x208] sm:$0xff]
    %v1540 = vld [vmem:[%s3 + $0x210] sm:$0xff]
    %v1541 = vld [vmem:[%s3 + $0x218] sm:$0xff]
    %v1542 = vld [vmem:[%s3 + $0x220] sm:$0xff]
    %v1543 = vld [vmem:[%s3 + $0x228] sm:$0xff]
    %v1544 = vld [vmem:[%s3 + $0x230] sm:$0xff]
    %v1545 = vld [vmem:[%s3 + $0x238] sm:$0xff]
    %v1546 = vld [vmem:[%s3 + $0x240] sm:$0xff]
    %v1547 = vld [vmem:[%s3 + $0x248] sm:$0xff]
    %v1548 = vld [vmem:[%s3 + $0x250] sm:$0xff]
    %v1549 = vld [vmem:[%s3 + $0x258] sm:$0xff]
    %v1550 = vld [vmem:[%s3 + $0x260] sm:$0xff]
    %v1551 = vld [vmem:[%s3 + $0x268] sm:$0xff]
    %v1552 = vld [vmem:[%s3 + $0x270] sm:$0xff]
    %v1553 = vld [vmem:[%s3 + $0x278] sm:$0xff]
    %v1554 = vld [vmem:[%s3 + $0x280] sm:$0xff]
    %v1555 = vld [vmem:[%s3 + $0x288] sm:$0xff]
    %v1556 = vld [vmem:[%s3 + $0x290] sm:$0xff]
    %v1557 = vld [vmem:[%s3 + $0x298] sm:$0xff]
    %v1558 = vld [vmem:[%s3 + $0x2a0] sm:$0xff]
    %v1559 = vld [vmem:[%s3 + $0x2a8] sm:$0xff]
    %v1560 = vld [vmem:[%s3 + $0x2b0] sm:$0xff]
    %v1561 = vld [vmem:[%s3 + $0x2b8] sm:$0xff]
    %v1562 = vld [vmem:[%s3 + $0x2c0] sm:$0xff]
    %v1563 = vld [vmem:[%s3 + $0x2c8] sm:$0xff]
    %v1564 = vld [vmem:[%s3 + $0x2d0] sm:$0xff]
    %v1565 = vld [vmem:[%s3 + $0x2d8] sm:$0xff]
    %v1566 = vld [vmem:[%s3 + $0x2e0] sm:$0xff]
    %v1567 = vld [vmem:[%s3 + $0x2e8] sm:$0xff]
    %v1568 = vld [vmem:[%s3 + $0x2f0] sm:$0xff]
    %v1569 = vld [vmem:[%s3 + $0x2f8] sm:$0xff]
    %v1570 = vrot.slane %v1390, 4
    %1572 = vmatpush.msra.mxu0 %v1568
    %1573 = vmatpush.msra.mxu0 %v1566
    %1574 = vmatpush.msra.mxu0 %v1564
    %1575 = vmatpush.msra.mxu0 %v1562
    %1576 = vmatpush.msra.mxu0 %v1560
    %1577 = vmatpush.msra.mxu0 %v1558
    %1578 = vmatpush.msra.mxu0 %v1556
    %1579 = vmatpush.msra.mxu0 %v1554
    %1580 = vmatpush.msra.mxu0 %v1552
    %1581 = vmatpush.msra.mxu0 %v1550
    %1582 = vmatpush.msra.mxu0 %v1548
    %1583 = vmatpush.msra.mxu0 %v1546
    %1584 = vmatpush.msra.mxu0 %v1544
    %1585 = vmatpush.msra.mxu0 %v1542
    %1586 = vmatpush.msra.mxu0 %v1540
    %1587 = vmatpush.msra.mxu0 %v1538
    %1588 = vmatmul.f32.gmra.mxu0 %v1570
    %v1589 = vpop.f32.mrf.mxu0
    %v1590 = vadd.f32 0.0, %v1589
    %1591 = vdwg.mxu0
    %1592 = vmatpush.msra.mxu0 %v1569
    %1593 = vmatpush.msra.mxu0 %v1567
    %1594 = vmatpush.msra.mxu0 %v1565
    %1595 = vmatpush.msra.mxu0 %v1563
    %1596 = vmatpush.msra.mxu0 %v1561
    %1597 = vmatpush.msra.mxu0 %v1559
    %1598 = vmatpush.msra.mxu0 %v1557
    %1599 = vmatpush.msra.mxu0 %v1555
    %1600 = vmatpush.msra.mxu0 %v1553
    %1601 = vmatpush.msra.mxu0 %v1551
    %1602 = vmatpush.msra.mxu0 %v1549
    %1603 = vmatpush.msra.mxu0 %v1547
    %1604 = vmatpush.msra.mxu0 %v1545
    %1605 = vmatpush.msra.mxu0 %v1543
    %1606 = vmatpush.msra.mxu0 %v1541
    %1607 = vmatpush.msra.mxu0 %v1539
    %1608 = vmatmul.f32.gmra.mxu0 %v1570
    %v1609 = vpop.f32.mrf.mxu0
    %v1610 = vadd.f32 0.0, %v1609
    %1611 = vdwg.mxu0
    %v1612 = vadd.f32 %v1516, %v1590
    %v1613 = vadd.f32 %v1536, %v1610
    %v1614 = vld [vmem:[%s9] sm:$0x3]
    %v1615 = vld [vmem:[%s4] sm:$0x3]
    %1617 = vset.pattern.permute.xlu0 0
    %1618 = vperm.xlu0 %1617, %v1614
    %v1619 = vpop.permute.xlu0 %1618
    %v1622 = vperm.slane %v1615, 0
    %v1623 = vperm.slane %v1615, 1
    %v1626 = vmul.f32 %v1619, %v1622
    %v1627 = vmul.f32 %v1619, %v1623
    %v1628 = vadd.f32 %v1612, %v1626
    %v1629 = vadd.f32 %v1613, %v1627
    %v1630 = vld [vmem:[%s10] sm:$0x3]
    %v1631 = vld [vmem:[%s5] sm:$0x3]
    %1633 = vset.pattern.permute.xlu0 0
    %1634 = vperm.xlu0 %1633, %v1630
    %v1635 = vpop.permute.xlu0 %1634
    %v1638 = vperm.slane %v1631, 0
    %v1639 = vperm.slane %v1631, 1
    %v1642 = vmul.f32 %v1635, %v1638
    %v1643 = vmul.f32 %v1635, %v1639
    %v1644 = vadd.f32 %v1628, %v1642
    %v1645 = vadd.f32 %v1629, %v1643
    %v1646 = vld [vmem:[%s6] sm:$0x3]
    %v1648 = vperm.slane %v1646, 0
    %v1649 = vperm.slane %v1646, 1
    %v1652 = vadd.f32 %v1644, %v1648
    %v1653 = vadd.f32 %v1645, %v1649
    %v1654 = vmax.f32 %v1652, 0.0
    %v1655 = vmax.f32 %v1653, 0.0
    %v1656 = vld [vmem:[%s7] sm:$0xff]
    %v1657 = vld [vmem:[%s7 + $0x8] sm:$0xff]
    %v1658 = vld [vmem:[%s7 + $0x10] sm:$0xff]
    %v1659 = vld [vmem:[%s7 + $0x18] sm:$0xff]
    %v1660 = vld [vmem:[%s7 + $0x20] sm:$0xff]
    %v1661 = vld [vmem:[%s7 + $0x28] sm:$0xff]
    %v1662 = vld [vmem:[%s7 + $0x30] sm:$0xff]
    %v1663 = vld [vmem:[%s7 + $0x38] sm:$0xff]
    %v1664 = vld [vmem:[%s7 + $0x40] sm:$0xff]
    %v1665 = vld [vmem:[%s7 + $0x48] sm:$0xff]
    %v1666 = vld [vmem:[%s7 + $0x50] sm:$0xff]
    %v1667 = vld [vmem:[%s7 + $0x58] sm:$0xff]
    %v1668 = vld [vmem:[%s7 + $0x60] sm:$0xff]
    %v1669 = vld [vmem:[%s7 + $0x68] sm:$0xff]
    %v1670 = vld [vmem:[%s7 + $0x70] sm:$0xff]
    %v1671 = vld [vmem:[%s7 + $0x78] sm:$0xff]
    %v1672 = vld [vmem:[%s7 + $0x80] sm:$0xff]
    %v1673 = vld [vmem:[%s7 + $0x88] sm:$0xff]
    %v1674 = vld [vmem:[%s7 + $0x90] sm:$0xff]
    %v1675 = vld [vmem:[%s7 + $0x98] sm:$0xff]
    %v1676 = vld [vmem:[%s7 + $0xa0] sm:$0xff]
    %v1677 = vld [vmem:[%s7 + $0xa8] sm:$0xff]
    %v1678 = vld [vmem:[%s7 + $0xb0] sm:$0xff]
    %v1679 = vld [vmem:[%s7 + $0xb8] sm:$0xff]
    %v1680 = vld [vmem:[%s7 + $0xc0] sm:$0xff]
    %v1681 = vld [vmem:[%s7 + $0xc8] sm:$0xff]
    %v1682 = vld [vmem:[%s7 + $0xd0] sm:$0xff]
    %v1683 = vld [vmem:[%s7 + $0xd8] sm:$0xff]
    %v1684 = vld [vmem:[%s7 + $0xe0] sm:$0xff]
    %v1685 = vld [vmem:[%s7 + $0xe8] sm:$0xff]
    %v1686 = vld [vmem:[%s7 + $0xf0] sm:$0xff]
    %v1687 = vld [vmem:[%s7 + $0xf8] sm:$0xff]
    %v1688 = vld [vmem:[%s8] sm:$0x1]
    %v1690 = vperm.slane %v1688, 0
    %1692 = vmatpush.msra.mxu0 %v1671
    %1693 = vmatpush.msra.mxu0 %v1670
    %1694 = vmatpush.msra.mxu0 %v1669
    %1695 = vmatpush.msra.mxu0 %v1668
    %1696 = vmatpush.msra.mxu0 %v1667
    %1697 = vmatpush.msra.mxu0 %v1666
    %1698 = vmatpush.msra.mxu0 %v1665
    %1699 = vmatpush.msra.mxu0 %v1664
    %1700 = vmatpush.msra.mxu0 %v1663
    %1701 = vmatpush.msra.mxu0 %v1662
    %1702 = vmatpush.msra.mxu0 %v1661
    %1703 = vmatpush.msra.mxu0 %v1660
    %1704 = vmatpush.msra.mxu0 %v1659
    %1705 = vmatpush.msra.mxu0 %v1658
    %1706 = vmatpush.msra.mxu0 %v1657
    %1707 = vmatpush.msra.mxu0 %v1656
    %1708 = vmatmul.f32.gmra.mxu0 %v1654
    %v1709 = vpop.f32.mrf.mxu0
    %v1710 = vadd.f32 %v1690, %v1709
    %1711 = vdwg.mxu0
    %1712 = vmatpush.msra.mxu0 %v1687
    %1713 = vmatpush.msra.mxu0 %v1686
    %1714 = vmatpush.msra.mxu0 %v1685
    %1715 = vmatpush.msra.mxu0 %v1684
    %1716 = vmatpush.msra.mxu0 %v1683
    %1717 = vmatpush.msra.mxu0 %v1682
    %1718 = vmatpush.msra.mxu0 %v1681
    %1719 = vmatpush.msra.mxu0 %v1680
    %1720 = vmatpush.msra.mxu0 %v1679
    %1721 = vmatpush.msra.mxu0 %v1678
    %1722 = vmatpush.msra.mxu0 %v1677
    %1723 = vmatpush.msra.mxu0 %v1676
    %1724 = vmatpush.msra.mxu0 %v1675
    %1725 = vmatpush.msra.mxu0 %v1674
    %1726 = vmatpush.msra.mxu0 %v1673
    %1727 = vmatpush.msra.mxu0 %v1672
    %1728 = vmatmul.f32.gmra.mxu0 %v1655
    %v1729 = vpop.f32.mrf.mxu0
    %v1730 = vadd.f32 %v1710, %v1729
    %1731 = vdwg.mxu0
    %1732 = vst [vmem:[#allocation2] sm:$0x3] %v1730
    // Predicated region
    $region46: #{lstm_model_forward.1} parent=1 // pred_check
      _
    $region47: #{lstm_model_forward.1} parent=1 // pred_check_branch
      %1734 = sbr.rel (0) target = $region49
    $region48: #{lstm_model_forward.1} parent=1 // pred_region
      %1736 = vsyncadd [#allocation3], 0
      %s1738 = sshll.u32 [#allocation2], 4
      %s1739 = int_to_ptr.vmem [resolvable:$true] %s1738
      %s1740 = sshll.u32 %s11, 4
      %s1741 = int_to_ptr.hbm [resolvable:$true] %s1740
      %1743 = dma.vmem_to_hbm [thread:$0]  %s1739, 32, %s1741, [#allocation3]
    $region49: #{lstm_model_forward.1} parent=1 // pred_fallthru
      _
    // Predicated region
    $region50: #{lstm_model_forward.1} parent=1 // pred_check
      _
    $region51: #{lstm_model_forward.1} parent=1 // pred_check_branch
      %1745 = sbr.rel (0) target = $region53
    $region52: #{lstm_model_forward.1} parent=1 // pred_region
      %1747 = dma.done [#allocation3], 32
    $region53: #{lstm_model_forward.1} parent=1 // pred_fallthru
      _
    %1748 = vsyncpa [#allocation3], 1

</llo_original>
